<compile_context>
chip_gen: v7x
topology: tpu7x:2x2x1
jax: 0.10.0
libtpu: 0.0.40
codegen_flags: <defaults>
</compile_context>

<pallas_src>
import functools
import math

import jax
import jax.numpy as jnp
from jax.experimental import pallas as pl
from jax.experimental.pallas import tpu as pltpu


def encoder_layer_kernel(x_ref, wqkv_ref, wo_ref, w1_ref, w2_ref,
                         bqkv_ref, b1_ref, vec_ref,
                         o_ref, attn_cat_ref, *,
                         n_heads, compute_dtype, dff_block, approx_recip, eps):
    Bt, S, D = x_ref.shape
    H = n_heads
    hd = D // H
    N = Bt * S
    cd = compute_dtype
    f32 = jnp.float32

    vec = vec_ref[...]          # (6, D) rows: [bo, b2, g1, beta1, g2, beta2]

    x_f32 = x_ref[...].astype(f32).reshape(N, D)     # residual master copy
    x_cd = x_f32.astype(cd)

    # ---- packed QKV projection (1/sqrt(hd) pre-folded into Wq / bq) ----
    qkv = (jnp.dot(x_cd, wqkv_ref[...], preferred_element_type=f32)
           + bqkv_ref[...]).astype(cd)               # (N, 3D) compute dtype

    # ---- per-head attention; PV results go to a VMEM concat scratch ----
    for h in range(H):                               # static, small H
        lo = h * hd
        q_h = qkv[:, lo:lo + hd].reshape(Bt, S, hd)
        k_h = qkv[:, D + lo:D + lo + hd].reshape(Bt, S, hd)
        v_h = qkv[:, 2 * D + lo:2 * D + lo + hd].reshape(Bt, S, hd)

        s = jnp.einsum("bqd,bkd->bqk", q_h, k_h,
                       preferred_element_type=f32)   # (Bt, S, S) f32
        s = s - jnp.max(s, axis=-1, keepdims=True)
        p = jnp.exp(s)
        p = p * pl.reciprocal(jnp.sum(p, axis=-1, keepdims=True),
                              approx=approx_recip)
        o_h = jnp.einsum("bqk,bkd->bqd", p.astype(cd), v_h,
                         preferred_element_type=f32)  # (Bt, S, hd) f32
        attn_cat_ref[:, lo:lo + hd] = o_h.reshape(N, hd).astype(cd)

    # Single full-depth (K = D) output projection + bias.
    attn = jnp.dot(attn_cat_ref[...], wo_ref[...],
                   preferred_element_type=f32) + vec[0:1, :]

    # ---- residual + LayerNorm1 (f32; dropout1 == identity in eval) ----
    y = x_f32 + attn
    mu = jnp.mean(y, axis=-1, keepdims=True)
    var = jnp.mean(jnp.square(y - mu), axis=-1, keepdims=True)
    y = (y - mu) * jax.lax.rsqrt(var + eps) * vec[2:3, :] + vec[3:4, :]
    y_cd = y.astype(cd)

    # ---- FFN: linear2(relu(linear1(y))), tiled over dff ----
    dff = w1_ref.shape[1]
    n_tiles = dff // dff_block
    if n_tiles == 1:
        h1 = jnp.dot(y_cd, w1_ref[...], preferred_element_type=f32) + b1_ref[...]
        h1 = jnp.maximum(h1, 0.0).astype(cd)
        h2 = jnp.dot(h1, w2_ref[...], preferred_element_type=f32)
    else:
        def ffn_tile(t, acc):
            k0 = pl.multiple_of(t * dff_block, dff_block)
            h1 = (jnp.dot(y_cd, w1_ref[:, pl.ds(k0, dff_block)],
                          preferred_element_type=f32)
                  + b1_ref[:, pl.ds(k0, dff_block)])
            h1 = jnp.maximum(h1, 0.0).astype(cd)
            return acc + jnp.dot(h1, w2_ref[pl.ds(k0, dff_block), :],
                                 preferred_element_type=f32)
        h2 = jax.lax.fori_loop(0, n_tiles, ffn_tile, jnp.zeros((N, D), f32))
    h2 = h2 + vec[1:2, :]

    # ---- residual + LayerNorm2 (f32; dropout2 == identity in eval) ----
    z = y + h2
    mu = jnp.mean(z, axis=-1, keepdims=True)
    var = jnp.mean(jnp.square(z - mu), axis=-1, keepdims=True)
    z = (z - mu) * jax.lax.rsqrt(var + eps) * vec[4:5, :] + vec[5:6, :]

    o_ref[...] = z.reshape(Bt, S, D).astype(o_ref.dtype)


def _divisors_desc(n):
    return [d for d in range(n, 0, -1) if n % d == 0]


def _vmem_capacity_bytes():
    try:
        cap = getattr(pltpu.get_tpu_info(), "vmem_capacity_bytes", None)
        if cap:
            return int(cap)
    except Exception:
        pass
    return 64 << 20       # conservative (v7x-sized) fallback


def _per_step_activation_bytes(bb, S, D, H, dff_block, in_bytes, cd_bytes):
    """Upper-bound per-grid-step activation VMEM (incl. scores & FFN hidden)."""
    del H
    N = bb * S
    b = 2 * 2 * bb * S * D * in_bytes       # pipelined in/out blocks (double-buffered)
    b += N * 3 * D * (4 + cd_bytes)         # QKV f32 accumulation + compute-dtype copy
    b += 3 * N * D * cd_bytes               # per-head q/k/v slice copies (summed)
    b += 3 * bb * S * S * 4                 # score / prob tensors in flight (f32)
    b += N * D * cd_bytes                   # attention concat scratch
    b += 4 * N * D * 4                      # attn / residual / y / z f32 temps
    b += N * dff_block * (4 + cd_bytes)     # FFN hidden tile
    b += N * D * 4                          # FFN output accumulator
    return b


def _pick_dff_block(dff, max_block=2048):
    if dff <= max_block:
        return dff
    for t in range((max_block // 256) * 256, 255, -256):   # multiples of 256
        if dff % t == 0:
            return t
    return dff


def transformer_encoder_layer_bsd(x_bsd, params, n_heads, *,
                                  compute_dtype=jnp.bfloat16,
                                  block_b=None, dff_block=None, eps=1e-5):
    """x_bsd: (B, S, D). Preferred entry point when stacking layers."""
    B, S, D = x_bsd.shape
    dff = params["w1"].shape[0]
    assert D % n_heads == 0
    hd = D // n_heads
    cd = compute_dtype
    cd_bytes = jnp.dtype(cd).itemsize
    in_bytes = x_bsd.dtype.itemsize
    f32 = jnp.float32

    if dff_block is None:
        dff_block = _pick_dff_block(dff)
    assert dff % dff_block == 0

    # Pre-transpose weights once, fold 1/sqrt(hd) into Wq / bq, cast to compute dtype.
    scale = 1.0 / math.sqrt(hd)
    row_scale = jnp.concatenate([jnp.full((D,), scale, f32), jnp.ones((2 * D,), f32)])
    wqkv_t = (params["wqkv"].astype(f32) * row_scale[:, None]).T.astype(cd)  # (D, 3D)
    bqkv = params["bqkv"].astype(f32) * row_scale[None, :]                   # (1, 3D)
    wo_t = params["wo"].T.astype(cd)            # (D, D)
    w1_t = params["w1"].T.astype(cd)            # (D, dff)
    w2_t = params["w2"].T.astype(cd)            # (dff, D)
    b1 = params["b1"].astype(f32)               # (1, dff)
    vec6 = jnp.concatenate(                     # pack 6 (1, D) vectors into 1 operand
        [params["bo"], params["b2"], params["g1"], params["beta1"],
         params["g2"], params["beta2"]], axis=0).astype(f32)                 # (6, D)

    # VMEM budget (weights are single-buffered whole-array residents).
    weight_bytes = (wqkv_t.size + wo_t.size + w1_t.size + w2_t.size) * cd_bytes
    pad_lanes = lambda n: ((n + 127) // 128) * 128
    small_bytes = 4 * 8 * (pad_lanes(3 * D) + pad_lanes(dff) + pad_lanes(D))

    vmem_cap = _vmem_capacity_bytes()
    usable = int(vmem_cap * 0.85)               # ~108 MiB on 128 MiB parts, ~54 MiB on v7x
    act_budget = max(2 << 20, usable - weight_bytes - small_bytes - (8 << 20))

    if block_b is None:
        min_steps = min(4, B)                   # >= 2 steps / TensorCore on v7x when possible
        block_b = 1
        for d in _divisors_desc(B):
            if B // d < min_steps:
                continue
            if _per_step_activation_bytes(d, S, D, n_heads, dff_block,
                                          in_bytes, cd_bytes) <= act_budget:
                block_b = d
                break
    assert B % block_b == 0
    grid_b = B // block_b

    needed = (weight_bytes + small_bytes
              + _per_step_activation_bytes(block_b, S, D, n_heads, dff_block,
                                           in_bytes, cd_bytes))
    vmem_limit = int(min(max(needed + (4 << 20), 32 << 20), usable))

    approx_recip = bool(jnp.dtype(cd) != jnp.dtype(jnp.float32))

    kernel = functools.partial(
        encoder_layer_kernel, n_heads=n_heads, compute_dtype=cd,
        dff_block=dff_block, approx_recip=approx_recip, eps=eps)

    # Grid-invariant operands: whole-array VMEM residents (no pipeline double-buffer).
    resident = pl.BlockSpec(memory_space=pltpu.MemorySpace.VMEM)

    out_bsd = pl.pallas_call(
        kernel,
        out_shape=jax.ShapeDtypeStruct((B, S, D), x_bsd.dtype),
        grid=(grid_b,),
        in_specs=[
            pl.BlockSpec((block_b, S, D), lambda i: (i, 0, 0)),   # x block (pipelined)
            resident,                                             # wqkv^T (D, 3D)
            resident,                                             # wo^T   (D, D)
            resident,                                             # w1^T   (D, dff)
            resident,                                             # w2^T   (dff, D)
            resident,                                             # bqkv   (1, 3D)
            resident,                                             # b1     (1, dff)
            resident,                                             # vec6   (6, D)
        ],
        out_specs=pl.BlockSpec((block_b, S, D), lambda i: (i, 0, 0)),
        scratch_shapes=[pltpu.VMEM((block_b * S, D), cd)],        # head concat buffer
        compiler_params=pltpu.CompilerParams(
            dimension_semantics=("parallel",),
            vmem_limit_bytes=vmem_limit),
    )(x_bsd, wqkv_t, wo_t, w1_t, w2_t, bqkv, b1, vec6)
    return out_bsd


def transformer_encoder_layer(x_sbd, params, n_heads, **kwargs):
    """PyTorch nn.MultiheadAttention convention: x is (S, B, D).

    Transpose only at the model boundary; stack layers on (B, S, D) via
    transformer_encoder_layer_bsd to avoid per-layer HBM transpose round-trips.
    """
    x_bsd = jnp.transpose(x_sbd, (1, 0, 2))
    out_bsd = transformer_encoder_layer_bsd(x_bsd, params, n_heads, **kwargs)
    return jnp.transpose(out_bsd, (1, 0, 2))


def reference_forward(x_sbd, params, n_heads, eps=1e-5):
    """Pure-JAX reference mirroring the PyTorch module (eval mode)."""
    S, B, D = x_sbd.shape
    hd = D // n_heads
    x = x_sbd.astype(jnp.float32)

    qkv = jnp.einsum("sbd,ed->sbe", x, params["wqkv"]) + params["bqkv"][0]
    q, k, v = qkv[..., :D], qkv[..., D:2 * D], qkv[..., 2 * D:]

    def split_heads(t):   # (S, B, D) -> (B, H, S, hd)
        return jnp.transpose(t.reshape(S, B, n_heads, hd), (1, 2, 0, 3))

    qh, kh, vh = split_heads(q), split_heads(k), split_heads(v)
    s = jnp.einsum("bhqd,bhkd->bhqk", qh * (1.0 / math.sqrt(hd)), kh)
    p = jax.nn.softmax(s, axis=-1)
    o = jnp.einsum("bhqk,bhkd->bhqd", p, vh)
    o = jnp.transpose(o, (2, 0, 1, 3)).reshape(S, B, D)
    attn = jnp.einsum("sbd,ed->sbe", o, params["wo"]) + params["bo"][0]

    def ln(t, g, b):
        mu = jnp.mean(t, axis=-1, keepdims=True)
        var = jnp.mean(jnp.square(t - mu), axis=-1, keepdims=True)
        return (t - mu) * jax.lax.rsqrt(var + eps) * g[0] + b[0]

    x = ln(x + attn, params["g1"], params["beta1"])
    h1 = jnp.maximum(jnp.einsum("sbd,fd->sbf", x, params["w1"]) + params["b1"][0], 0.0)
    h2 = jnp.einsum("sbf,df->sbd", h1, params["w2"]) + params["b2"][0]
    x = ln(x + h2, params["g2"], params["beta2"])
    return x


def make_params(key, d_model, n_heads, dim_feedforward):
    ks = jax.random.split(key, 8)
    scale = 0.05
    return {
        "wqkv": scale * jax.random.normal(ks[0], (3 * d_model, d_model), jnp.float32),
        "bqkv": scale * jax.random.normal(ks[1], (1, 3 * d_model), jnp.float32),
        "wo":   scale * jax.random.normal(ks[2], (d_model, d_model), jnp.float32),
        "bo":   scale * jax.random.normal(ks[3], (1, d_model), jnp.float32),
        "w1":   scale * jax.random.normal(ks[4], (dim_feedforward, d_model), jnp.float32),
        "b1":   scale * jax.random.normal(ks[5], (1, dim_feedforward), jnp.float32),
        "w2":   scale * jax.random.normal(ks[6], (d_model, dim_feedforward), jnp.float32),
        "b2":   scale * jax.random.normal(ks[7], (1, d_model), jnp.float32),
        # LayerNorm init matches PyTorch defaults: weight=1, bias=0
        "g1":    jnp.ones((1, d_model), jnp.float32),
        "beta1": jnp.zeros((1, d_model), jnp.float32),
        "g2":    jnp.ones((1, d_model), jnp.float32),
        "beta2": jnp.zeros((1, d_model), jnp.float32),
    }


if __name__ == "__main__":
    S, B = 8, 4
    d_model, n_heads, dim_feedforward = 32, 4, 64

    key = jax.random.PRNGKey(0)
    kx, kp = jax.random.split(key)
    x = jax.random.normal(kx, (S, B, d_model), dtype=jnp.float32)
    params = make_params(kp, d_model, n_heads, dim_feedforward)

    ref = reference_forward(x, params, n_heads)

    # Strict-numerics path (f32 MXU operands, exact reciprocal).
    out_f32 = transformer_encoder_layer(x, params, n_heads, compute_dtype=jnp.float32)
    out_f32 = jax.block_until_ready(out_f32)
    assert out_f32.shape == (S, B, d_model)
    assert jnp.allclose(out_f32, ref, atol=2e-3, rtol=2e-3), "f32 path mismatch vs reference"

    # Default fast path (bf16 MXU operands, f32 accumulation / softmax / LayerNorm).
    out_bf16 = transformer_encoder_layer(x, params, n_heads)
    out_bf16 = jax.block_until_ready(out_bf16)
    assert out_bf16.shape == (S, B, d_model)
    assert jnp.allclose(out_bf16, ref, atol=5e-2, rtol=5e-2), "bf16 path mismatch vs reference"

    print("KERNEL_OK")
</pallas_src>

<mosaic_0001>
module attributes {stable_mosaic.version = 11 : i64} {
  func.func @encoder_layer_kernel(%arg0: i32, %arg1: memref<1x8x32xf32, #tpu.memory_space<vmem>>, %arg2: memref<32x96xf32, #tpu.memory_space<vmem>>, %arg3: memref<32x32xf32, #tpu.memory_space<vmem>>, %arg4: memref<32x64xf32, #tpu.memory_space<vmem>>, %arg5: memref<64x32xf32, #tpu.memory_space<vmem>>, %arg6: memref<1x96xf32, #tpu.memory_space<vmem>>, %arg7: memref<1x64xf32, #tpu.memory_space<vmem>>, %arg8: memref<6x32xf32, #tpu.memory_space<vmem>>, %arg9: memref<1x8x32xf32, #tpu.memory_space<vmem>>, %arg10: memref<8x32xf32, #tpu.memory_space<vmem>>) attributes {dimension_semantics = [#tpu.dimension_semantics<parallel>], iteration_bounds = array<i64: 4>, scalar_prefetch = 0 : i64, scratch_operands = 1 : i64, tpu.core_type = #tpu.core_type<tc>, window_params = [{transform_indices = @transform_0, window_bounds = array<i64: 1, 8, 32>}, {pipeline_mode = #tpu.pipeline_mode<synchronous>, transform_indices = @transform_1, window_bounds = array<i64: 32, 96>}, {pipeline_mode = #tpu.pipeline_mode<synchronous>, transform_indices = @transform_2, window_bounds = array<i64: 32, 32>}, {pipeline_mode = #tpu.pipeline_mode<synchronous>, transform_indices = @transform_3, window_bounds = array<i64: 32, 64>}, {pipeline_mode = #tpu.pipeline_mode<synchronous>, transform_indices = @transform_4, window_bounds = array<i64: 64, 32>}, {pipeline_mode = #tpu.pipeline_mode<synchronous>, transform_indices = @transform_5, window_bounds = array<i64: 1, 96>}, {pipeline_mode = #tpu.pipeline_mode<synchronous>, transform_indices = @transform_6, window_bounds = array<i64: 1, 64>}, {pipeline_mode = #tpu.pipeline_mode<synchronous>, transform_indices = @transform_7, window_bounds = array<i64: 6, 32>}, {transform_indices = @transform_8, window_bounds = array<i64: 1, 8, 32>}]} {
    %c0 = arith.constant 0 : index
    %c0_0 = arith.constant 0 : index
    %0 = vector.load %arg8[%c0, %c0_0] : memref<6x32xf32, #tpu.memory_space<vmem>>, vector<6x32xf32>
    %c0_1 = arith.constant 0 : index
    %c0_2 = arith.constant 0 : index
    %c0_3 = arith.constant 0 : index
    %1 = vector.load %arg1[%c0_1, %c0_2, %c0_3] : memref<1x8x32xf32, #tpu.memory_space<vmem>>, vector<1x8x32xf32>
    %2 = vector.shape_cast %1 : vector<1x8x32xf32> to vector<8x32xf32>
    %c0_4 = arith.constant 0 : index
    %c0_5 = arith.constant 0 : index
    %3 = vector.load %arg2[%c0_4, %c0_5] : memref<32x96xf32, #tpu.memory_space<vmem>>, vector<32x96xf32>
    %cst = arith.constant dense<0.000000e+00> : vector<8x96xf32>
    %4 = tpu.matmul %2, %3, %cst {dimension_numbers = #tpu.dot_dimension_numbers<[1], [0], [0], [1], [0, 0, 1, 1], [], []>} : vector<8x32xf32>, vector<32x96xf32>, vector<8x96xf32> -> vector<8x96xf32>
    %c0_6 = arith.constant 0 : index
    %c0_7 = arith.constant 0 : index
    %5 = vector.load %arg6[%c0_6, %c0_7] : memref<1x96xf32, #tpu.memory_space<vmem>>, vector<1x96xf32>
    %6 = vector.broadcast %5 : vector<1x96xf32> to vector<8x96xf32>
    %7 = arith.addf %4, %6 : vector<8x96xf32>
    %8 = vector.extract_strided_slice %7 {offsets = [0, 0], sizes = [8, 8], strides = [1, 1]} : vector<8x96xf32> to vector<8x8xf32>
    %9 = vector.shape_cast %8 : vector<8x8xf32> to vector<1x8x8xf32>
    %10 = vector.extract_strided_slice %7 {offsets = [0, 32], sizes = [8, 8], strides = [1, 1]} : vector<8x96xf32> to vector<8x8xf32>
    %11 = vector.shape_cast %10 : vector<8x8xf32> to vector<1x8x8xf32>
    %12 = vector.extract_strided_slice %7 {offsets = [0, 64], sizes = [8, 8], strides = [1, 1]} : vector<8x96xf32> to vector<8x8xf32>
    %13 = vector.shape_cast %12 : vector<8x8xf32> to vector<1x8x8xf32>
    "tpu.trace_start"() <{level = 10 : i32, message = "bqd,bkd->bqk"}> : () -> ()
    %cst_8 = arith.constant dense<0.000000e+00> : vector<1x8x8xf32>
    %14 = tpu.matmul %9, %11, %cst_8 {dimension_numbers = #tpu.dot_dimension_numbers<[2], [2], [1], [1], [0, 0, 0, 1, 1, 1], [0], [0]>} : vector<1x8x8xf32>, vector<1x8x8xf32>, vector<1x8x8xf32> -> vector<1x8x8xf32>
    "tpu.trace_stop"() : () -> ()
    %cst_9 = arith.constant dense<0xFF800000> : vector<1x8xf32>
    %15 = vector.multi_reduction <maximumf>, %14, %cst_9 [2] : vector<1x8x8xf32> to vector<1x8xf32>
    %16 = vector.shape_cast %15 : vector<1x8xf32> to vector<1x8x1xf32>
    %17 = vector.broadcast %16 : vector<1x8x1xf32> to vector<1x8x8xf32>
    %18 = arith.subf %14, %17 : vector<1x8x8xf32>
    %19 = math.exp %18 : vector<1x8x8xf32>
    %cst_10 = arith.constant dense<0.000000e+00> : vector<1x8xf32>
    %20 = vector.multi_reduction <add>, %19, %cst_10 [2] : vector<1x8x8xf32> to vector<1x8xf32>
    %21 = vector.shape_cast %20 : vector<1x8xf32> to vector<1x8x1xf32>
    %22 = tpu.reciprocal %21 : vector<1x8x1xf32> -> vector<1x8x1xf32>
    %23 = vector.broadcast %22 : vector<1x8x1xf32> to vector<1x8x8xf32>
    %24 = arith.mulf %19, %23 : vector<1x8x8xf32>
    "tpu.trace_start"() <{level = 10 : i32, message = "bqk,bkd->bqd"}> : () -> ()
    %cst_11 = arith.constant dense<0.000000e+00> : vector<1x8x8xf32>
    %25 = tpu.matmul %24, %13, %cst_11 {dimension_numbers = #tpu.dot_dimension_numbers<[2], [1], [1], [2], [0, 0, 0, 1, 1, 2], [0], [0]>} : vector<1x8x8xf32>, vector<1x8x8xf32>, vector<1x8x8xf32> -> vector<1x8x8xf32>
    "tpu.trace_stop"() : () -> ()
    %26 = vector.shape_cast %25 : vector<1x8x8xf32> to vector<8x8xf32>
    %c0_12 = arith.constant 0 : index
    %c0_13 = arith.constant 0 : index
    %27 = vector.load %arg10[%c0_12, %c0_13] : memref<8x32xf32, #tpu.memory_space<vmem>>, vector<8x8xf32>
    tpu.vector_store %arg10[%c0_12, %c0_13], %26 {strides = array<i32>} : memref<8x32xf32, #tpu.memory_space<vmem>>, vector<8x8xf32>,
    %28 = vector.extract_strided_slice %7 {offsets = [0, 8], sizes = [8, 8], strides = [1, 1]} : vector<8x96xf32> to vector<8x8xf32>
    %29 = vector.shape_cast %28 : vector<8x8xf32> to vector<1x8x8xf32>
    %30 = vector.extract_strided_slice %7 {offsets = [0, 40], sizes = [8, 8], strides = [1, 1]} : vector<8x96xf32> to vector<8x8xf32>
    %31 = vector.shape_cast %30 : vector<8x8xf32> to vector<1x8x8xf32>
    %32 = vector.extract_strided_slice %7 {offsets = [0, 72], sizes = [8, 8], strides = [1, 1]} : vector<8x96xf32> to vector<8x8xf32>
    %33 = vector.shape_cast %32 : vector<8x8xf32> to vector<1x8x8xf32>
    "tpu.trace_start"() <{level = 10 : i32, message = "bqd,bkd->bqk"}> : () -> ()
    %cst_14 = arith.constant dense<0.000000e+00> : vector<1x8x8xf32>
    %34 = tpu.matmul %29, %31, %cst_14 {dimension_numbers = #tpu.dot_dimension_numbers<[2], [2], [1], [1], [0, 0, 0, 1, 1, 1], [0], [0]>} : vector<1x8x8xf32>, vector<1x8x8xf32>, vector<1x8x8xf32> -> vector<1x8x8xf32>
    "tpu.trace_stop"() : () -> ()
    %cst_15 = arith.constant dense<0xFF800000> : vector<1x8xf32>
    %35 = vector.multi_reduction <maximumf>, %34, %cst_15 [2] : vector<1x8x8xf32> to vector<1x8xf32>
    %36 = vector.shape_cast %35 : vector<1x8xf32> to vector<1x8x1xf32>
    %37 = vector.broadcast %36 : vector<1x8x1xf32> to vector<1x8x8xf32>
    %38 = arith.subf %34, %37 : vector<1x8x8xf32>
    %39 = math.exp %38 : vector<1x8x8xf32>
    %cst_16 = arith.constant dense<0.000000e+00> : vector<1x8xf32>
    %40 = vector.multi_reduction <add>, %39, %cst_16 [2] : vector<1x8x8xf32> to vector<1x8xf32>
    %41 = vector.shape_cast %40 : vector<1x8xf32> to vector<1x8x1xf32>
    %42 = tpu.reciprocal %41 : vector<1x8x1xf32> -> vector<1x8x1xf32>
    %43 = vector.broadcast %42 : vector<1x8x1xf32> to vector<1x8x8xf32>
    %44 = arith.mulf %39, %43 : vector<1x8x8xf32>
    "tpu.trace_start"() <{level = 10 : i32, message = "bqk,bkd->bqd"}> : () -> ()
    %cst_17 = arith.constant dense<0.000000e+00> : vector<1x8x8xf32>
    %45 = tpu.matmul %44, %33, %cst_17 {dimension_numbers = #tpu.dot_dimension_numbers<[2], [1], [1], [2], [0, 0, 0, 1, 1, 2], [0], [0]>} : vector<1x8x8xf32>, vector<1x8x8xf32>, vector<1x8x8xf32> -> vector<1x8x8xf32>
    "tpu.trace_stop"() : () -> ()
    %46 = vector.shape_cast %45 : vector<1x8x8xf32> to vector<8x8xf32>
    %c0_18 = arith.constant 0 : index
    %c8 = arith.constant 8 : index
    %47 = vector.load %arg10[%c0_18, %c8] : memref<8x32xf32, #tpu.memory_space<vmem>>, vector<8x8xf32>
    tpu.vector_store %arg10[%c0_18, %c8], %46 {strides = array<i32>} : memref<8x32xf32, #tpu.memory_space<vmem>>, vector<8x8xf32>,
    %48 = vector.extract_strided_slice %7 {offsets = [0, 16], sizes = [8, 8], strides = [1, 1]} : vector<8x96xf32> to vector<8x8xf32>
    %49 = vector.shape_cast %48 : vector<8x8xf32> to vector<1x8x8xf32>
    %50 = vector.extract_strided_slice %7 {offsets = [0, 48], sizes = [8, 8], strides = [1, 1]} : vector<8x96xf32> to vector<8x8xf32>
    %51 = vector.shape_cast %50 : vector<8x8xf32> to vector<1x8x8xf32>
    %52 = vector.extract_strided_slice %7 {offsets = [0, 80], sizes = [8, 8], strides = [1, 1]} : vector<8x96xf32> to vector<8x8xf32>
    %53 = vector.shape_cast %52 : vector<8x8xf32> to vector<1x8x8xf32>
    "tpu.trace_start"() <{level = 10 : i32, message = "bqd,bkd->bqk"}> : () -> ()
    %cst_19 = arith.constant dense<0.000000e+00> : vector<1x8x8xf32>
    %54 = tpu.matmul %49, %51, %cst_19 {dimension_numbers = #tpu.dot_dimension_numbers<[2], [2], [1], [1], [0, 0, 0, 1, 1, 1], [0], [0]>} : vector<1x8x8xf32>, vector<1x8x8xf32>, vector<1x8x8xf32> -> vector<1x8x8xf32>
    "tpu.trace_stop"() : () -> ()
    %cst_20 = arith.constant dense<0xFF800000> : vector<1x8xf32>
    %55 = vector.multi_reduction <maximumf>, %54, %cst_20 [2] : vector<1x8x8xf32> to vector<1x8xf32>
    %56 = vector.shape_cast %55 : vector<1x8xf32> to vector<1x8x1xf32>
    %57 = vector.broadcast %56 : vector<1x8x1xf32> to vector<1x8x8xf32>
    %58 = arith.subf %54, %57 : vector<1x8x8xf32>
    %59 = math.exp %58 : vector<1x8x8xf32>
    %cst_21 = arith.constant dense<0.000000e+00> : vector<1x8xf32>
    %60 = vector.multi_reduction <add>, %59, %cst_21 [2] : vector<1x8x8xf32> to vector<1x8xf32>
    %61 = vector.shape_cast %60 : vector<1x8xf32> to vector<1x8x1xf32>
    %62 = tpu.reciprocal %61 : vector<1x8x1xf32> -> vector<1x8x1xf32>
    %63 = vector.broadcast %62 : vector<1x8x1xf32> to vector<1x8x8xf32>
    %64 = arith.mulf %59, %63 : vector<1x8x8xf32>
    "tpu.trace_start"() <{level = 10 : i32, message = "bqk,bkd->bqd"}> : () -> ()
    %cst_22 = arith.constant dense<0.000000e+00> : vector<1x8x8xf32>
    %65 = tpu.matmul %64, %53, %cst_22 {dimension_numbers = #tpu.dot_dimension_numbers<[2], [1], [1], [2], [0, 0, 0, 1, 1, 2], [0], [0]>} : vector<1x8x8xf32>, vector<1x8x8xf32>, vector<1x8x8xf32> -> vector<1x8x8xf32>
    "tpu.trace_stop"() : () -> ()
    %66 = vector.shape_cast %65 : vector<1x8x8xf32> to vector<8x8xf32>
    %c0_23 = arith.constant 0 : index
    %c16 = arith.constant 16 : index
    %67 = vector.load %arg10[%c0_23, %c16] : memref<8x32xf32, #tpu.memory_space<vmem>>, vector<8x8xf32>
    tpu.vector_store %arg10[%c0_23, %c16], %66 {strides = array<i32>} : memref<8x32xf32, #tpu.memory_space<vmem>>, vector<8x8xf32>,
    %68 = vector.extract_strided_slice %7 {offsets = [0, 24], sizes = [8, 8], strides = [1, 1]} : vector<8x96xf32> to vector<8x8xf32>
    %69 = vector.shape_cast %68 : vector<8x8xf32> to vector<1x8x8xf32>
    %70 = vector.extract_strided_slice %7 {offsets = [0, 56], sizes = [8, 8], strides = [1, 1]} : vector<8x96xf32> to vector<8x8xf32>
    %71 = vector.shape_cast %70 : vector<8x8xf32> to vector<1x8x8xf32>
    %72 = vector.extract_strided_slice %7 {offsets = [0, 88], sizes = [8, 8], strides = [1, 1]} : vector<8x96xf32> to vector<8x8xf32>
    %73 = vector.shape_cast %72 : vector<8x8xf32> to vector<1x8x8xf32>
    "tpu.trace_start"() <{level = 10 : i32, message = "bqd,bkd->bqk"}> : () -> ()
    %cst_24 = arith.constant dense<0.000000e+00> : vector<1x8x8xf32>
    %74 = tpu.matmul %69, %71, %cst_24 {dimension_numbers = #tpu.dot_dimension_numbers<[2], [2], [1], [1], [0, 0, 0, 1, 1, 1], [0], [0]>} : vector<1x8x8xf32>, vector<1x8x8xf32>, vector<1x8x8xf32> -> vector<1x8x8xf32>
    "tpu.trace_stop"() : () -> ()
    %cst_25 = arith.constant dense<0xFF800000> : vector<1x8xf32>
    %75 = vector.multi_reduction <maximumf>, %74, %cst_25 [2] : vector<1x8x8xf32> to vector<1x8xf32>
    %76 = vector.shape_cast %75 : vector<1x8xf32> to vector<1x8x1xf32>
    %77 = vector.broadcast %76 : vector<1x8x1xf32> to vector<1x8x8xf32>
    %78 = arith.subf %74, %77 : vector<1x8x8xf32>
    %79 = math.exp %78 : vector<1x8x8xf32>
    %cst_26 = arith.constant dense<0.000000e+00> : vector<1x8xf32>
    %80 = vector.multi_reduction <add>, %79, %cst_26 [2] : vector<1x8x8xf32> to vector<1x8xf32>
    %81 = vector.shape_cast %80 : vector<1x8xf32> to vector<1x8x1xf32>
    %82 = tpu.reciprocal %81 : vector<1x8x1xf32> -> vector<1x8x1xf32>
    %83 = vector.broadcast %82 : vector<1x8x1xf32> to vector<1x8x8xf32>
    %84 = arith.mulf %79, %83 : vector<1x8x8xf32>
    "tpu.trace_start"() <{level = 10 : i32, message = "bqk,bkd->bqd"}> : () -> ()
    %cst_27 = arith.constant dense<0.000000e+00> : vector<1x8x8xf32>
    %85 = tpu.matmul %84, %73, %cst_27 {dimension_numbers = #tpu.dot_dimension_numbers<[2], [1], [1], [2], [0, 0, 0, 1, 1, 2], [0], [0]>} : vector<1x8x8xf32>, vector<1x8x8xf32>, vector<1x8x8xf32> -> vector<1x8x8xf32>
    "tpu.trace_stop"() : () -> ()
    %86 = vector.shape_cast %85 : vector<1x8x8xf32> to vector<8x8xf32>
    %c0_28 = arith.constant 0 : index
    %c24 = arith.constant 24 : index
    %87 = vector.load %arg10[%c0_28, %c24] : memref<8x32xf32, #tpu.memory_space<vmem>>, vector<8x8xf32>
    tpu.vector_store %arg10[%c0_28, %c24], %86 {strides = array<i32>} : memref<8x32xf32, #tpu.memory_space<vmem>>, vector<8x8xf32>,
    %c0_29 = arith.constant 0 : index
    %c0_30 = arith.constant 0 : index
    %88 = vector.load %arg10[%c0_29, %c0_30] : memref<8x32xf32, #tpu.memory_space<vmem>>, vector<8x32xf32>
    %c0_31 = arith.constant 0 : index
    %c0_32 = arith.constant 0 : index
    %89 = vector.load %arg3[%c0_31, %c0_32] : memref<32x32xf32, #tpu.memory_space<vmem>>, vector<32x32xf32>
    %cst_33 = arith.constant dense<0.000000e+00> : vector<8x32xf32>
    %90 = tpu.matmul %88, %89, %cst_33 {dimension_numbers = #tpu.dot_dimension_numbers<[1], [0], [0], [1], [0, 0, 1, 1], [], []>} : vector<8x32xf32>, vector<32x32xf32>, vector<8x32xf32> -> vector<8x32xf32>
    %91 = vector.extract_strided_slice %0 {offsets = [0, 0], sizes = [1, 32], strides = [1, 1]} : vector<6x32xf32> to vector<1x32xf32>
    %92 = vector.broadcast %91 : vector<1x32xf32> to vector<8x32xf32>
    %93 = arith.addf %90, %92 : vector<8x32xf32>
    %94 = arith.addf %2, %93 : vector<8x32xf32>
    %cst_34 = arith.constant dense<0.000000e+00> : vector<8xf32>
    %95 = vector.multi_reduction <add>, %94, %cst_34 [1] : vector<8x32xf32> to vector<8xf32>
    %96 = vector.shape_cast %95 : vector<8xf32> to vector<8x1xf32>
    %cst_35 = arith.constant 3.200000e+01 : f32
    %97 = vector.broadcast %cst_35 : f32 to vector<8x1xf32>
    %98 = arith.divf %96, %97 : vector<8x1xf32>
    %99 = vector.broadcast %98 : vector<8x1xf32> to vector<8x32xf32>
    %100 = arith.subf %94, %99 : vector<8x32xf32>
    %101 = arith.mulf %100, %100 : vector<8x32xf32>
    %cst_36 = arith.constant dense<0.000000e+00> : vector<8xf32>
    %102 = vector.multi_reduction <add>, %101, %cst_36 [1] : vector<8x32xf32> to vector<8xf32>
    %103 = vector.shape_cast %102 : vector<8xf32> to vector<8x1xf32>
    %cst_37 = arith.constant 3.200000e+01 : f32
    %104 = vector.broadcast %cst_37 : f32 to vector<8x1xf32>
    %105 = arith.divf %103, %104 : vector<8x1xf32>
    %106 = vector.broadcast %98 : vector<8x1xf32> to vector<8x32xf32>
    %107 = arith.subf %94, %106 : vector<8x32xf32>
    %cst_38 = arith.constant 9.99999974E-6 : f32
    %108 = vector.broadcast %cst_38 : f32 to vector<8x1xf32>
    %109 = arith.addf %105, %108 : vector<8x1xf32>
    %110 = math.rsqrt %109 : vector<8x1xf32>
    %111 = vector.broadcast %110 : vector<8x1xf32> to vector<8x32xf32>
    %112 = arith.mulf %107, %111 : vector<8x32xf32>
    %113 = vector.extract_strided_slice %0 {offsets = [2, 0], sizes = [1, 32], strides = [1, 1]} : vector<6x32xf32> to vector<1x32xf32>
    %114 = vector.broadcast %113 : vector<1x32xf32> to vector<8x32xf32>
    %115 = arith.mulf %112, %114 : vector<8x32xf32>
    %116 = vector.extract_strided_slice %0 {offsets = [3, 0], sizes = [1, 32], strides = [1, 1]} : vector<6x32xf32> to vector<1x32xf32>
    %117 = vector.broadcast %116 : vector<1x32xf32> to vector<8x32xf32>
    %118 = arith.addf %115, %117 : vector<8x32xf32>
    %c0_39 = arith.constant 0 : index
    %c0_40 = arith.constant 0 : index
    %119 = vector.load %arg4[%c0_39, %c0_40] : memref<32x64xf32, #tpu.memory_space<vmem>>, vector<32x64xf32>
    %cst_41 = arith.constant dense<0.000000e+00> : vector<8x64xf32>
    %120 = tpu.matmul %118, %119, %cst_41 {dimension_numbers = #tpu.dot_dimension_numbers<[1], [0], [0], [1], [0, 0, 1, 1], [], []>} : vector<8x32xf32>, vector<32x64xf32>, vector<8x64xf32> -> vector<8x64xf32>
    %c0_42 = arith.constant 0 : index
    %c0_43 = arith.constant 0 : index
    %121 = vector.load %arg7[%c0_42, %c0_43] : memref<1x64xf32, #tpu.memory_space<vmem>>, vector<1x64xf32>
    %122 = vector.broadcast %121 : vector<1x64xf32> to vector<8x64xf32>
    %123 = arith.addf %120, %122 : vector<8x64xf32>
    %cst_44 = arith.constant 0.000000e+00 : f32
    %124 = vector.broadcast %cst_44 : f32 to vector<8x64xf32>
    %125 = arith.maximumf %123, %124 : vector<8x64xf32>
    %c0_45 = arith.constant 0 : index
    %c0_46 = arith.constant 0 : index
    %126 = vector.load %arg5[%c0_45, %c0_46] : memref<64x32xf32, #tpu.memory_space<vmem>>, vector<64x32xf32>
    %cst_47 = arith.constant dense<0.000000e+00> : vector<8x32xf32>
    %127 = tpu.matmul %125, %126, %cst_47 {dimension_numbers = #tpu.dot_dimension_numbers<[1], [0], [0], [1], [0, 0, 1, 1], [], []>} : vector<8x64xf32>, vector<64x32xf32>, vector<8x32xf32> -> vector<8x32xf32>
    %128 = vector.extract_strided_slice %0 {offsets = [1, 0], sizes = [1, 32], strides = [1, 1]} : vector<6x32xf32> to vector<1x32xf32>
    %129 = vector.broadcast %128 : vector<1x32xf32> to vector<8x32xf32>
    %130 = arith.addf %127, %129 : vector<8x32xf32>
    %131 = arith.addf %118, %130 : vector<8x32xf32>
    %cst_48 = arith.constant dense<0.000000e+00> : vector<8xf32>
    %132 = vector.multi_reduction <add>, %131, %cst_48 [1] : vector<8x32xf32> to vector<8xf32>
    %133 = vector.shape_cast %132 : vector<8xf32> to vector<8x1xf32>
    %cst_49 = arith.constant 3.200000e+01 : f32
    %134 = vector.broadcast %cst_49 : f32 to vector<8x1xf32>
    %135 = arith.divf %133, %134 : vector<8x1xf32>
    %136 = vector.broadcast %135 : vector<8x1xf32> to vector<8x32xf32>
    %137 = arith.subf %131, %136 : vector<8x32xf32>
    %138 = arith.mulf %137, %137 : vector<8x32xf32>
    %cst_50 = arith.constant dense<0.000000e+00> : vector<8xf32>
    %139 = vector.multi_reduction <add>, %138, %cst_50 [1] : vector<8x32xf32> to vector<8xf32>
    %140 = vector.shape_cast %139 : vector<8xf32> to vector<8x1xf32>
    %cst_51 = arith.constant 3.200000e+01 : f32
    %141 = vector.broadcast %cst_51 : f32 to vector<8x1xf32>
    %142 = arith.divf %140, %141 : vector<8x1xf32>
    %143 = vector.broadcast %135 : vector<8x1xf32> to vector<8x32xf32>
    %144 = arith.subf %131, %143 : vector<8x32xf32>
    %cst_52 = arith.constant 9.99999974E-6 : f32
    %145 = vector.broadcast %cst_52 : f32 to vector<8x1xf32>
    %146 = arith.addf %142, %145 : vector<8x1xf32>
    %147 = math.rsqrt %146 : vector<8x1xf32>
    %148 = vector.broadcast %147 : vector<8x1xf32> to vector<8x32xf32>
    %149 = arith.mulf %144, %148 : vector<8x32xf32>
    %150 = vector.extract_strided_slice %0 {offsets = [4, 0], sizes = [1, 32], strides = [1, 1]} : vector<6x32xf32> to vector<1x32xf32>
    %151 = vector.broadcast %150 : vector<1x32xf32> to vector<8x32xf32>
    %152 = arith.mulf %149, %151 : vector<8x32xf32>
    %153 = vector.extract_strided_slice %0 {offsets = [5, 0], sizes = [1, 32], strides = [1, 1]} : vector<6x32xf32> to vector<1x32xf32>
    %154 = vector.broadcast %153 : vector<1x32xf32> to vector<8x32xf32>
    %155 = arith.addf %152, %154 : vector<8x32xf32>
    %156 = vector.shape_cast %155 : vector<8x32xf32> to vector<1x8x32xf32>
    %c0_53 = arith.constant 0 : index
    %c0_54 = arith.constant 0 : index
    %c0_55 = arith.constant 0 : index
    %157 = vector.load %arg9[%c0_53, %c0_54, %c0_55] : memref<1x8x32xf32, #tpu.memory_space<vmem>>, vector<1x8x32xf32>
    tpu.vector_store %arg9[%c0_53, %c0_54, %c0_55], %156 {strides = array<i32>} : memref<1x8x32xf32, #tpu.memory_space<vmem>>, vector<1x8x32xf32>,
    return
  }
  func.func @transform_0(%arg0: i32) -> (i32, i32, i32) {
    %c0_i32 = arith.constant 0 : i32
    %c0_i32_0 = arith.constant 0 : i32
    %c0_i32_1 = arith.constant 0 : i32
    return %arg0, %c0_i32, %c0_i32_0 : i32, i32, i32
  }
  func.func @transform_1(%arg0: i32) -> (i32, i32) {
    %c0_i32 = arith.constant 0 : i32
    %c0_i32_0 = arith.constant 0 : i32
    %c0_i32_1 = arith.constant 0 : i32
    return %c0_i32, %c0_i32_0 : i32, i32
  }
  func.func @transform_2(%arg0: i32) -> (i32, i32) {
    %c0_i32 = arith.constant 0 : i32
    %c0_i32_0 = arith.constant 0 : i32
    %c0_i32_1 = arith.constant 0 : i32
    return %c0_i32, %c0_i32_0 : i32, i32
  }
  func.func @transform_3(%arg0: i32) -> (i32, i32) {
    %c0_i32 = arith.constant 0 : i32
    %c0_i32_0 = arith.constant 0 : i32
    %c0_i32_1 = arith.constant 0 : i32
    return %c0_i32, %c0_i32_0 : i32, i32
  }
  func.func @transform_4(%arg0: i32) -> (i32, i32) {
    %c0_i32 = arith.constant 0 : i32
    %c0_i32_0 = arith.constant 0 : i32
    %c0_i32_1 = arith.constant 0 : i32
    return %c0_i32, %c0_i32_0 : i32, i32
  }
  func.func @transform_5(%arg0: i32) -> (i32, i32) {
    %c0_i32 = arith.constant 0 : i32
    %c0_i32_0 = arith.constant 0 : i32
    %c0_i32_1 = arith.constant 0 : i32
    return %c0_i32, %c0_i32_0 : i32, i32
  }
  func.func @transform_6(%arg0: i32) -> (i32, i32) {
    %c0_i32 = arith.constant 0 : i32
    %c0_i32_0 = arith.constant 0 : i32
    %c0_i32_1 = arith.constant 0 : i32
    return %c0_i32, %c0_i32_0 : i32, i32
  }
  func.func @transform_7(%arg0: i32) -> (i32, i32) {
    %c0_i32 = arith.constant 0 : i32
    %c0_i32_0 = arith.constant 0 : i32
    %c0_i32_1 = arith.constant 0 : i32
    return %c0_i32, %c0_i32_0 : i32, i32
  }
  func.func @transform_8(%arg0: i32) -> (i32, i32, i32) {
    %c0_i32 = arith.constant 0 : i32
    %c0_i32_0 = arith.constant 0 : i32
    %c0_i32_1 = arith.constant 0 : i32
    return %arg0, %c0_i32, %c0_i32_0 : i32, i32, i32
  }
}

</mosaic_0001>

<llo_original>
// kernel: tpu_custom_call.1
$region0: #{tpu_custom_call.1}
  #allocation0 [shape = 'u32[]', space=smem, size = 0x4, offset = 0x4, fixed_abs, tag = 'smem constant byte address 0x4 - core index']
  #allocation1 [shape = 'u32[144,128]{1,0:T(1,128)}', space=vmem, size = 0x12000, scoped, tag = 'internal scratch']
  #allocation2 [shape = 'f32[8,32]{1,0:T(8,128)}', space=vmem, size = 0x1000, scoped, tag = 'scratch operand']
  %s0 = inlined_call_operand.vmem [shape: f32[4,8,32], index: 0, kind: input, shape index: {}]
  %s1 = inlined_call_operand.vmem [shape: f32[32,96], index: 1, kind: input, shape index: {}]
  %s2 = inlined_call_operand.vmem [shape: f32[32,32], index: 2, kind: input, shape index: {}]
  %s3 = inlined_call_operand.hbm [shape: f32[32,64], index: 3, kind: input, shape index: {}]
  %s4 = inlined_call_operand.vmem [shape: f32[64,32], index: 4, kind: input, shape index: {}]
  %s5 = inlined_call_operand.vmem [shape: f32[1,96], index: 5, kind: input, shape index: {}]
  %s6 = inlined_call_operand.vmem [shape: f32[1,64], index: 6, kind: input, shape index: {}]
  %s7 = inlined_call_operand.vmem [shape: f32[6,32], index: 7, kind: input, shape index: {}]
  %s8 = inlined_call_operand.hbm [shape: f32[4,8,32], index: 8, kind: output, shape index: {}]
  %s9 = sld [smem:[#allocation0]]
  $region69: #{tpu_custom_call.1} parent=0
    _
  %s11 = ssub.s32 1, %s9
  %s12 = scalar_select 0, %s11, %s9
  $region1: #{tpu_custom_call.1} parent=0
    #allocation3 [shape = 'u8[16384]{0}', space=vmem, size = 0x4000, scoped, tag = 'input window, operand 3, single buffered']
    #allocation4 [shape = 's32[2]{0}', space=sflag, size = 0x8, scoped, tag = 'scoped memory for tpu_custom_call.1']
    #allocation5 [shape = 's32[2]{0}', space=sflag, size = 0x8, scoped, tag = 'scoped memory for tpu_custom_call.1']
    #allocation6 [shape = 'u8[8192]{0}', space=vmem, size = 0x2000, scoped, tag = 'output window, operand 0']
    %13 = vsyncpa [#allocation4], 0
    %14 = vsyncpa [#allocation5], 0
    %s15 = scalar_lea.sflag [#allocation5], 1
    %16 = vsyncpa %s15, 0
    loop: start=0, step=1, limit=6
    $region2: #{tpu_custom_call.1} parent=1 // loop_pre_header
      _
    $region3: #{tpu_custom_call.1} parent=1 // loop_header
      %s18 = sphi 0, %s22
      %p19 = scmp.ge.s32.totalorder %s18, 6
      %s28 = sphi 0, %s30
      %s31 = sphi 0, %s28
      %s32 = sphi 0, %s31
      %s48 = sphi 0, %s32
      %s52 = sphi 0, %s52
      %s54 = sphi 0, %s52
      %s55 = sphi 0, %s54
      %s69 = sphi 0, %s55
      %s73 = sphi 0, %s73
      %s75 = sphi 0, %s73
      %s76 = sphi 0, %s75
      %s90 = sphi 0, %s76
      %s94 = sphi 0, %s94
      %s96 = sphi 0, %s94
      %s97 = sphi 0, %s96
      %s111 = sphi 0, %s97
      %s115 = sphi 0, %s115
      %s117 = sphi 0, %s115
      %s118 = sphi 0, %s117
      %s132 = sphi 0, %s118
      %s136 = sphi 0, %s136
      %s138 = sphi 0, %s136
      %s139 = sphi 0, %s138
      %s153 = sphi 0, %s139
      %s157 = sphi 0, %s157
      %s159 = sphi 0, %s157
      %s160 = sphi 0, %s159
      %s174 = sphi 0, %s160
      %s178 = sphi 0, %s178
      %s180 = sphi 0, %s178
      %s181 = sphi 0, %s180
      %s195 = sphi 0, %s181
      %s201 = sphi 0, %s203
      %s204 = sphi 0, %s201
      %s205 = sphi 0, %s204
      %s221 = sphi 0, %s205
    $region4: #{tpu_custom_call.1} parent=1 // loop_header_branch
      %21 = sbr.rel (%p19) target = $region8
    $region5: #{tpu_custom_call.1} parent=1 // loop_body
      %s23 = ssub.s32 %s18, 1
      %s24 = ssub.s32 %s18, 2
      %s25 = sadd.s32 %s18, 1
      %s26 = ssub.s32 %s18, %s25
      %p27 = scmp.eq.s32.totalorder %s26, 0
      %s29 = sadd.s32 %s28, 1
      %s30 = scalar_select %p27, %s28, %s29
      %p33 = pneg %p27
      %p34 = scmp.eq.s32.totalorder %s18, 3
      %p35 = por %p33, %p34
      %p36 = scmp.ne.s32.totalorder %s28, %s31
      %p37 = scmp.eq.s32.totalorder %s18, 0
      %p38 = por %p36, %p37
      %p39 = scmp.ne.s32.totalorder %s28, %s31
      %p40 = scmp.eq.s32.totalorder %s23, 3
      %p41 = por %p39, %p40
      %p42 = scmp.ne.s32.totalorder %s31, %s32
      %p43 = scmp.eq.s32.totalorder %s23, 0
      %p44 = por %p42, %p43
      %p45 = scmp.ne.s32.totalorder %s31, %s32
      %p46 = scmp.eq.s32.totalorder %s24, 3
      %p47 = por %p45, %p46
      %p49 = scmp.ne.s32.totalorder %s32, %s48
      %p50 = scmp.eq.s32.totalorder %s24, 0
      %p51 = por %p49, %p50
      %s53 = sadd.s32 %s52, 1
      %p56 = scmp.eq.s32.totalorder %s18, 3
      %p57 = scmp.ne.s32.totalorder %s52, %s54
      %p58 = scmp.eq.s32.totalorder %s18, 0
      %p59 = por %p57, %p58
      %p60 = scmp.ne.s32.totalorder %s52, %s54
      %p61 = scmp.eq.s32.totalorder %s23, 3
      %p62 = por %p60, %p61
      %p63 = scmp.ne.s32.totalorder %s54, %s55
      %p64 = scmp.eq.s32.totalorder %s23, 0
      %p65 = por %p63, %p64
      %p66 = scmp.ne.s32.totalorder %s54, %s55
      %p67 = scmp.eq.s32.totalorder %s24, 3
      %p68 = por %p66, %p67
      %p70 = scmp.ne.s32.totalorder %s55, %s69
      %p71 = scmp.eq.s32.totalorder %s24, 0
      %p72 = por %p70, %p71
      %s74 = sadd.s32 %s73, 1
      %p77 = scmp.eq.s32.totalorder %s18, 3
      %p78 = scmp.ne.s32.totalorder %s73, %s75
      %p79 = scmp.eq.s32.totalorder %s18, 0
      %p80 = por %p78, %p79
      %p81 = scmp.ne.s32.totalorder %s73, %s75
      %p82 = scmp.eq.s32.totalorder %s23, 3
      %p83 = por %p81, %p82
      %p84 = scmp.ne.s32.totalorder %s75, %s76
      %p85 = scmp.eq.s32.totalorder %s23, 0
      %p86 = por %p84, %p85
      %p87 = scmp.ne.s32.totalorder %s75, %s76
      %p88 = scmp.eq.s32.totalorder %s24, 3
      %p89 = por %p87, %p88
      %p91 = scmp.ne.s32.totalorder %s76, %s90
      %p92 = scmp.eq.s32.totalorder %s24, 0
      %p93 = por %p91, %p92
      %s95 = sadd.s32 %s94, 1
      %p98 = scmp.eq.s32.totalorder %s18, 3
      %p99 = scmp.ne.s32.totalorder %s94, %s96
      %p100 = scmp.eq.s32.totalorder %s18, 0
      %p101 = por %p99, %p100
      %p102 = scmp.ne.s32.totalorder %s94, %s96
      %p103 = scmp.eq.s32.totalorder %s23, 3
      %p104 = por %p102, %p103
      %p105 = scmp.ne.s32.totalorder %s96, %s97
      %p106 = scmp.eq.s32.totalorder %s23, 0
      %p107 = por %p105, %p106
      %p108 = scmp.ne.s32.totalorder %s96, %s97
      %p109 = scmp.eq.s32.totalorder %s24, 3
      %p110 = por %p108, %p109
      %p112 = scmp.ne.s32.totalorder %s97, %s111
      %p113 = scmp.eq.s32.totalorder %s24, 0
      %p114 = por %p112, %p113
      %s116 = sadd.s32 %s115, 1
      %p119 = scmp.eq.s32.totalorder %s18, 3
      %p120 = scmp.ne.s32.totalorder %s115, %s117
      %p121 = scmp.eq.s32.totalorder %s18, 0
      %p122 = por %p120, %p121
      %p123 = scmp.ne.s32.totalorder %s115, %s117
      %p124 = scmp.eq.s32.totalorder %s23, 3
      %p125 = por %p123, %p124
      %p126 = scmp.ne.s32.totalorder %s117, %s118
      %p127 = scmp.eq.s32.totalorder %s23, 0
      %p128 = por %p126, %p127
      %p129 = scmp.ne.s32.totalorder %s117, %s118
      %p130 = scmp.eq.s32.totalorder %s24, 3
      %p131 = por %p129, %p130
      %p133 = scmp.ne.s32.totalorder %s118, %s132
      %p134 = scmp.eq.s32.totalorder %s24, 0
      %p135 = por %p133, %p134
      %s137 = sadd.s32 %s136, 1
      %p140 = scmp.eq.s32.totalorder %s18, 3
      %p141 = scmp.ne.s32.totalorder %s136, %s138
      %p142 = scmp.eq.s32.totalorder %s18, 0
      %p143 = por %p141, %p142
      %p144 = scmp.ne.s32.totalorder %s136, %s138
      %p145 = scmp.eq.s32.totalorder %s23, 3
      %p146 = por %p144, %p145
      %p147 = scmp.ne.s32.totalorder %s138, %s139
      %p148 = scmp.eq.s32.totalorder %s23, 0
      %p149 = por %p147, %p148
      %p150 = scmp.ne.s32.totalorder %s138, %s139
      %p151 = scmp.eq.s32.totalorder %s24, 3
      %p152 = por %p150, %p151
      %p154 = scmp.ne.s32.totalorder %s139, %s153
      %p155 = scmp.eq.s32.totalorder %s24, 0
      %p156 = por %p154, %p155
      %s158 = sadd.s32 %s157, 1
      %p161 = scmp.eq.s32.totalorder %s18, 3
      %p162 = scmp.ne.s32.totalorder %s157, %s159
      %p163 = scmp.eq.s32.totalorder %s18, 0
      %p164 = por %p162, %p163
      %p165 = scmp.ne.s32.totalorder %s157, %s159
      %p166 = scmp.eq.s32.totalorder %s23, 3
      %p167 = por %p165, %p166
      %p168 = scmp.ne.s32.totalorder %s159, %s160
      %p169 = scmp.eq.s32.totalorder %s23, 0
      %p170 = por %p168, %p169
      %p171 = scmp.ne.s32.totalorder %s159, %s160
      %p172 = scmp.eq.s32.totalorder %s24, 3
      %p173 = por %p171, %p172
      %p175 = scmp.ne.s32.totalorder %s160, %s174
      %p176 = scmp.eq.s32.totalorder %s24, 0
      %p177 = por %p175, %p176
      %s179 = sadd.s32 %s178, 1
      %p182 = scmp.eq.s32.totalorder %s18, 3
      %p183 = scmp.ne.s32.totalorder %s178, %s180
      %p184 = scmp.eq.s32.totalorder %s18, 0
      %p185 = por %p183, %p184
      %p186 = scmp.ne.s32.totalorder %s178, %s180
      %p187 = scmp.eq.s32.totalorder %s23, 3
      %p188 = por %p186, %p187
      %p189 = scmp.ne.s32.totalorder %s180, %s181
      %p190 = scmp.eq.s32.totalorder %s23, 0
      %p191 = por %p189, %p190
      %p192 = scmp.ne.s32.totalorder %s180, %s181
      %p193 = scmp.eq.s32.totalorder %s24, 3
      %p194 = por %p192, %p193
      %p196 = scmp.ne.s32.totalorder %s181, %s195
      %p197 = scmp.eq.s32.totalorder %s24, 0
      %p198 = por %p196, %p197
      %s199 = ssub.s32 %s18, %s25
      %p200 = scmp.eq.s32.totalorder %s199, 0
      %s202 = sadd.s32 %s201, 1
      %s203 = scalar_select %p200, %s201, %s202
      %p206 = pneg %p200
      %p207 = scmp.eq.s32.totalorder %s18, 3
      %p208 = por %p206, %p207
      %p209 = scmp.ne.s32.totalorder %s201, %s204
      %p210 = scmp.eq.s32.totalorder %s18, 0
      %p211 = por %p209, %p210
      %p212 = scmp.ne.s32.totalorder %s201, %s204
      %p213 = scmp.eq.s32.totalorder %s23, 3
      %p214 = por %p212, %p213
      %p215 = scmp.ne.s32.totalorder %s204, %s205
      %p216 = scmp.eq.s32.totalorder %s23, 0
      %p217 = por %p215, %p216
      %p218 = scmp.ne.s32.totalorder %s204, %s205
      %p219 = scmp.eq.s32.totalorder %s24, 3
      %p220 = por %p218, %p219
      %p222 = scmp.ne.s32.totalorder %s205, %s221
      %p223 = scmp.eq.s32.totalorder %s24, 0
      %p224 = por %p222, %p223
      %p225 = scmp.le.s32.totalorder 1, %s18
      %p226 = scmp.lt.s32.totalorder %s18, 5
      %p227 = pnand %p225, %p226
      %p228 = pneg %p227
      // Predicated region
      $region9: #{tpu_custom_call.1} parent=5 // pred_check
        _
      $region10: #{tpu_custom_call.1} parent=5 // pred_check_branch
        %230 = sbr.rel (%p227) target = $region12
      $region11: #{tpu_custom_call.1} parent=5 // pred_region
        %s231 = ssub.s32 %s18, 1
        // Predicated region
        $region13: #{tpu_custom_call.1} parent=11 // pred_check
          %p232 = pneg %p65
        $region14: #{tpu_custom_call.1} parent=11 // pred_check_branch
          %234 = sbr.rel (%p232) target = $region16
        $region15: #{tpu_custom_call.1} parent=11 // pred_region
          _
        $region16: #{tpu_custom_call.1} parent=11 // pred_fallthru
          _
        // Predicated region
        $region17: #{tpu_custom_call.1} parent=11 // pred_check
          %p235 = pneg %p86
        $region18: #{tpu_custom_call.1} parent=11 // pred_check_branch
          %237 = sbr.rel (%p235) target = $region20
        $region19: #{tpu_custom_call.1} parent=11 // pred_region
          _
        $region20: #{tpu_custom_call.1} parent=11 // pred_fallthru
          _
        // Predicated region
        $region21: #{tpu_custom_call.1} parent=11 // pred_check
          %p238 = pneg %p107
        $region22: #{tpu_custom_call.1} parent=11 // pred_check_branch
          %240 = sbr.rel (%p238) target = $region24
        $region23: #{tpu_custom_call.1} parent=11 // pred_region
          %s242 = ssub.s32 512, 512
          %243 = vsyncadd [#allocation4], %s242
          %s244 = sshll.u32 [#allocation3], 4
          %s245 = int_to_ptr.vmem [resolvable:$true] %s244
          %250 = dma.hbm_to_vmem [thread:$0]  %s3, 512, %s245, [#allocation4], 128, 128, 8
        $region24: #{tpu_custom_call.1} parent=11 // pred_fallthru
          _
        // Predicated region
        $region25: #{tpu_custom_call.1} parent=11 // pred_check
          %p251 = pneg %p128
        $region26: #{tpu_custom_call.1} parent=11 // pred_check_branch
          %253 = sbr.rel (%p251) target = $region28
        $region27: #{tpu_custom_call.1} parent=11 // pred_region
          _
        $region28: #{tpu_custom_call.1} parent=11 // pred_fallthru
          _
        // Predicated region
        $region29: #{tpu_custom_call.1} parent=11 // pred_check
          %p254 = pneg %p149
        $region30: #{tpu_custom_call.1} parent=11 // pred_check_branch
          %256 = sbr.rel (%p254) target = $region32
        $region31: #{tpu_custom_call.1} parent=11 // pred_region
          _
        $region32: #{tpu_custom_call.1} parent=11 // pred_fallthru
          _
        // Predicated region
        $region33: #{tpu_custom_call.1} parent=11 // pred_check
          %p257 = pneg %p170
        $region34: #{tpu_custom_call.1} parent=11 // pred_check_branch
          %259 = sbr.rel (%p257) target = $region36
        $region35: #{tpu_custom_call.1} parent=11 // pred_region
          _
        $region36: #{tpu_custom_call.1} parent=11 // pred_fallthru
          _
        // Predicated region
        $region37: #{tpu_custom_call.1} parent=11 // pred_check
          %p260 = pneg %p191
        $region38: #{tpu_custom_call.1} parent=11 // pred_check_branch
          %262 = sbr.rel (%p260) target = $region40
        $region39: #{tpu_custom_call.1} parent=11 // pred_region
          _
        $region40: #{tpu_custom_call.1} parent=11 // pred_fallthru
          _
      $region12: #{tpu_custom_call.1} parent=5 // pred_fallthru
        _
      %p263 = scmp.lt.s32.totalorder %s18, 4
      // Predicated region
      $region41: #{tpu_custom_call.1} parent=5 // pred_check
        %p264 = pneg %p263
      $region42: #{tpu_custom_call.1} parent=5 // pred_check_branch
        %266 = sbr.rel (%p264) target = $region44
      $region43: #{tpu_custom_call.1} parent=5 // pred_region
        // Predicated region
        $region45: #{tpu_custom_call.1} parent=43 // pred_check
          %p267 = pneg %p38
        $region46: #{tpu_custom_call.1} parent=43 // pred_check_branch
          %269 = sbr.rel (%p267) target = $region48
        $region47: #{tpu_custom_call.1} parent=43 // pred_region
          %p270 = scmp.lt.s32.totalorder %s18, 3
          %s271 = scalar_select %p270, %s18, 3
          %s272 = smul.addr %s271, 8
          %s273 = scalar_lea.vmem %s0, %s272
        $region48: #{tpu_custom_call.1} parent=43 // pred_fallthru
          _
      $region44: #{tpu_custom_call.1} parent=5 // pred_fallthru
        _
      %p274 = scmp.le.s32.totalorder 1, %s18
      %p275 = scmp.lt.s32.totalorder %s18, 5
      %p276 = pnand %p274, %p275
      %p277 = pneg %p276
      // Predicated region
      $region49: #{tpu_custom_call.1} parent=5 // pred_check
        _
      $region50: #{tpu_custom_call.1} parent=5 // pred_check_branch
        %279 = sbr.rel (%p276) target = $region52
      $region51: #{tpu_custom_call.1} parent=5 // pred_region
        %s280 = ssub.s32 %s18, 1
        // Predicated region
        $region53: #{tpu_custom_call.1} parent=51 // pred_check
          %p281 = pneg %p107
        $region54: #{tpu_custom_call.1} parent=51 // pred_check_branch
          %283 = sbr.rel (%p281) target = $region56
        $region55: #{tpu_custom_call.1} parent=51 // pred_region
          %284 = dma.done [#allocation4], 512
        $region56: #{tpu_custom_call.1} parent=51 // pred_fallthru
          _
        %p285 = scmp.lt.s32.totalorder %s23, 3
        %s286 = scalar_select %p285, %s23, 3
        %s287 = smul.addr %s286, 8
        %s288 = scalar_lea.vmem %s0, %s287
        %p289 = pneg %p44
        %p290 = pneg %p41
        %p291 = pneg %p65
        %p292 = pneg %p62
        %p293 = pneg %p86
        %p294 = pneg %p83
        %p295 = pneg %p107
        %p296 = pneg %p104
        %p297 = pneg %p128
        %p298 = pneg %p125
        %p299 = pneg %p149
        %p300 = pneg %p146
        %p301 = pneg %p170
        %p302 = pneg %p167
        %p303 = pneg %p191
        %p304 = pneg %p188
        %p305 = pneg %p217
        %p306 = pneg %p214
        %s307 = sand.u32 %s204, 1
        %s308 = scalar_lea.sflag [#allocation5], %s307
        %s309 = sand.u32 %s204, 1
        %s310 = smul.addr %s309, 8
        %s311 = scalar_lea.vmem [#allocation6], %s310
        %p312 = scmp.lt.s32.totalorder %s23, 3
        %s313 = scalar_select %p312, %s23, 3
        %s314 = smul.addr %s313, 8
        %s315 = scalar_lea.vmem %s0, %s314
        %v316 = vld [vmem:[%s7] sm:$0x3f]
        %v317 = vld [vmem:[%s315] sm:$0xff]
        %v318 = vld [vmem:[%s1] sm:$0xff]
        %v319 = vld [vmem:[%s1 + $0x8] sm:$0xff]
        %v320 = vld [vmem:[%s1 + $0x10] sm:$0xff]
        %v321 = vld [vmem:[%s1 + $0x18] sm:$0xff]
        %v322 = vld [vmem:[%s5] sm:$0x1]
        %v324 = vlaneseq
        %v325 = vshrl.u32 %v324, 7
        %v326 = vsub.s32 0, %v325
        %v327 = vrot.slane %v322, %v326
        %vm329 = vcmask 261120
        %v331 = vsel %vm329, %v317, 0
        %333 = vmatprep.subr.mxu0 0.0
        %334 = vmatpush1.msra.mxu0 %v318
        %335 = vmatprep.subr.mxu0 0.0
        %336 = vmatpush1.msra.mxu0 %v319
        %337 = vmatprep.subr.mxu0 0.0
        %338 = vmatpush1.msra.mxu0 %v320
        %339 = vmatprep.subr.mxu0 0.0
        %340 = vmatpush1.msra.mxu0 %v321
        %341 = vmatprep.subr.mxu0 0.0
        %342 = vmatpush1.msra.mxu0 0.0
        %343 = vmatprep.subr.mxu0 0.0
        %344 = vmatpush1.msra.mxu0 0.0
        %345 = vmatprep.subr.mxu0 0.0
        %346 = vmatpush1.msra.mxu0 0.0
        %347 = vmatprep.subr.mxu0 0.0
        %348 = vmatpush1.msra.mxu0 0.0
        %349 = vmatprep.subr.mxu0 0.0
        %350 = vmatpush1.msra.mxu0 0.0
        %351 = vmatprep.subr.mxu0 0.0
        %352 = vmatpush1.msra.mxu0 0.0
        %353 = vmatprep.subr.mxu0 0.0
        %354 = vmatpush1.msra.mxu0 0.0
        %355 = vmatprep.subr.mxu0 0.0
        %356 = vmatpush1.msra.mxu0 0.0
        %357 = vmatprep.subr.mxu0 0.0
        %358 = vmatpush1.msra.mxu0 0.0
        %359 = vmatprep.subr.mxu0 0.0
        %360 = vmatpush1.msra.mxu0 0.0
        %361 = vmatprep.subr.mxu0 0.0
        %362 = vmatpush1.msra.mxu0 0.0
        %363 = vmatprep.subr.mxu0 0.0
        %364 = vmatpush1.msra.mxu0 0.0
        %365 = vmatprep.subr.mxu0 0.0
        %366 = vmatpush1.msra.mxu0 0.0
        %367 = vmatprep.subr.mxu0 0.0
        %368 = vmatpush1.msra.mxu0 0.0
        %369 = vmatprep.subr.mxu0 0.0
        %370 = vmatpush1.msra.mxu0 0.0
        %371 = vmatprep.subr.mxu0 0.0
        %372 = vmatpush1.msra.mxu0 0.0
        %373 = vmatprep.subr.mxu0 0.0
        %374 = vmatpush1.msra.mxu0 0.0
        %375 = vmatprep.subr.mxu0 0.0
        %376 = vmatpush1.msra.mxu0 0.0
        %377 = vmatprep.subr.mxu0 0.0
        %378 = vmatpush1.msra.mxu0 0.0
        %379 = vmatprep.subr.mxu0 0.0
        %380 = vmatpush1.msra.mxu0 0.0
        %381 = vmatprep.subr.mxu0 0.0
        %382 = vmatpush1.msra.mxu0 0.0
        %383 = vmatprep.subr.mxu0 0.0
        %384 = vmatpush1.msra.mxu0 0.0
        %385 = vmatprep.subr.mxu0 0.0
        %386 = vmatpush1.msra.mxu0 0.0
        %387 = vmatprep.subr.mxu0 0.0
        %388 = vmatpush1.msra.mxu0 0.0
        %389 = vmatprep.subr.mxu0 0.0
        %390 = vmatpush1.msra.mxu0 0.0
        %391 = vmatprep.subr.mxu0 0.0
        %392 = vmatpush1.msra.mxu0 0.0
        %393 = vmatprep.subr.mxu0 0.0
        %394 = vmatpush1.msra.mxu0 0.0
        %395 = vmatprep.subr.mxu0 0.0
        %396 = vmatpush1.msra.mxu0 0.0
        %397 = vmatprep.mubr.f32.mxu0 0.0
        %398 = vmatmul.mubr.f32.gmra.mrb[0].mxu0 %v331
        %v399 = vpop.f32.mrb[0].mxu0
        %v400 = vadd.f32 %v327, %v399
        %v401 = vpop.f32.mrb[0].mxu0
        %402 = vdwg.mxu0
        %404 = vrot.lane.b32.xlu0 %v400, 96
        %v405 = vpop.permute.xlu0 %404
        %vm406 = vcmask 64512
        %v407 = vsel %vm406, %v400, 0
        %v409 = vsel %vm406, %v405, 0
        %411 = vmatprep.subr.mxu0 0.0
        %412 = vmatpush1.xpose.msra.mxu0 %v409
        %413 = vmatprep.subr.mxu0 0.0
        %414 = vmatpush1.xpose.msra.mxu0 0.0
        %415 = vmatprep.subr.mxu0 0.0
        %416 = vmatpush1.xpose.msra.mxu0 0.0
        %417 = vmatprep.subr.mxu0 0.0
        %418 = vmatpush1.xpose.msra.mxu0 0.0
        %419 = vmatprep.subr.mxu0 0.0
        %420 = vmatpush1.xpose.msra.mxu0 0.0
        %421 = vmatprep.subr.mxu0 0.0
        %422 = vmatpush1.xpose.msra.mxu0 0.0
        %423 = vmatprep.subr.mxu0 0.0
        %424 = vmatpush1.xpose.msra.mxu0 0.0
        %425 = vmatprep.subr.mxu0 0.0
        %426 = vmatpush1.xpose.msra.mxu0 0.0
        %427 = vmatprep.subr.mxu0 0.0
        %428 = vmatpush1.xpose.msra.mxu0 0.0
        %429 = vmatprep.subr.mxu0 0.0
        %430 = vmatpush1.xpose.msra.mxu0 0.0
        %431 = vmatprep.subr.mxu0 0.0
        %432 = vmatpush1.xpose.msra.mxu0 0.0
        %433 = vmatprep.subr.mxu0 0.0
        %434 = vmatpush1.xpose.msra.mxu0 0.0
        %435 = vmatprep.subr.mxu0 0.0
        %436 = vmatpush1.xpose.msra.mxu0 0.0
        %437 = vmatprep.subr.mxu0 0.0
        %438 = vmatpush1.xpose.msra.mxu0 0.0
        %439 = vmatprep.subr.mxu0 0.0
        %440 = vmatpush1.xpose.msra.mxu0 0.0
        %441 = vmatprep.subr.mxu0 0.0
        %442 = vmatpush1.xpose.msra.mxu0 0.0
        %443 = vmatprep.subr.mxu0 0.0
        %444 = vmatpush1.xpose.msra.mxu0 0.0
        %445 = vmatprep.subr.mxu0 0.0
        %446 = vmatpush1.xpose.msra.mxu0 0.0
        %447 = vmatprep.subr.mxu0 0.0
        %448 = vmatpush1.xpose.msra.mxu0 0.0
        %449 = vmatprep.subr.mxu0 0.0
        %450 = vmatpush1.xpose.msra.mxu0 0.0
        %451 = vmatprep.subr.mxu0 0.0
        %452 = vmatpush1.xpose.msra.mxu0 0.0
        %453 = vmatprep.subr.mxu0 0.0
        %454 = vmatpush1.xpose.msra.mxu0 0.0
        %455 = vmatprep.subr.mxu0 0.0
        %456 = vmatpush1.xpose.msra.mxu0 0.0
        %457 = vmatprep.subr.mxu0 0.0
        %458 = vmatpush1.xpose.msra.mxu0 0.0
        %459 = vmatprep.subr.mxu0 0.0
        %460 = vmatpush1.xpose.msra.mxu0 0.0
        %461 = vmatprep.subr.mxu0 0.0
        %462 = vmatpush1.xpose.msra.mxu0 0.0
        %463 = vmatprep.subr.mxu0 0.0
        %464 = vmatpush1.xpose.msra.mxu0 0.0
        %465 = vmatprep.subr.mxu0 0.0
        %466 = vmatpush1.xpose.msra.mxu0 0.0
        %467 = vmatprep.subr.mxu0 0.0
        %468 = vmatpush1.xpose.msra.mxu0 0.0
        %469 = vmatprep.subr.mxu0 0.0
        %470 = vmatpush1.xpose.msra.mxu0 0.0
        %471 = vmatprep.subr.mxu0 0.0
        %472 = vmatpush1.xpose.msra.mxu0 0.0
        %473 = vmatprep.subr.mxu0 0.0
        %474 = vmatpush1.xpose.msra.mxu0 0.0
        %475 = vmatprep.mubr.f32.mxu0 0.0
        %476 = vmatmul.mubr.f32.gmra.mrb[0].mxu0 %v407
        %v477 = vpop.f32.mrb[0].mxu0
        %v478 = vadd.f32 0.0, %v477
        %v479 = vpop.f32.mrb[0].mxu0
        %480 = vdwg.mxu0
        %v481 = vsel %vm406, %v478, -inf
        %482 = vmax.xlane.f32.xlu0 %v481
        %v483 = vpop.xlane.xlu0 %482
        %v484 = vsub.f32 %v478, %v483
        %v485 = vmul.f32 %v484, 1.442695
        %v486 = vpow.pop %v485
        %v487 = vsel %vm406, %v486, 0.0
        %488 = vadd.xlane.f32.xlu0 %v487
        %v489 = vpop.xlane.xlu0 %488
        %v490 = vrcp.pop %v489
        %v491 = vmul.f32 %v486, %v490
        %492 = vrot.lane.b32.xlu0 %v400, 64
        %v493 = vpop.permute.xlu0 %492
        %v496 = vsel %vm406, %v491, 0
        %498 = vmatprep.subr.mxu0 0.0
        %499 = vmatpush1.msra.mxu0 %v493
        %500 = vmatprep.subr.mxu0 0.0
        %501 = vmatpush1.msra.mxu0 0.0
        %502 = vmatprep.subr.mxu0 0.0
        %503 = vmatpush1.msra.mxu0 0.0
        %504 = vmatprep.subr.mxu0 0.0
        %505 = vmatpush1.msra.mxu0 0.0
        %506 = vmatprep.subr.mxu0 0.0
        %507 = vmatpush1.msra.mxu0 0.0
        %508 = vmatprep.subr.mxu0 0.0
        %509 = vmatpush1.msra.mxu0 0.0
        %510 = vmatprep.subr.mxu0 0.0
        %511 = vmatpush1.msra.mxu0 0.0
        %512 = vmatprep.subr.mxu0 0.0
        %513 = vmatpush1.msra.mxu0 0.0
        %514 = vmatprep.subr.mxu0 0.0
        %515 = vmatpush1.msra.mxu0 0.0
        %516 = vmatprep.subr.mxu0 0.0
        %517 = vmatpush1.msra.mxu0 0.0
        %518 = vmatprep.subr.mxu0 0.0
        %519 = vmatpush1.msra.mxu0 0.0
        %520 = vmatprep.subr.mxu0 0.0
        %521 = vmatpush1.msra.mxu0 0.0
        %522 = vmatprep.subr.mxu0 0.0
        %523 = vmatpush1.msra.mxu0 0.0
        %524 = vmatprep.subr.mxu0 0.0
        %525 = vmatpush1.msra.mxu0 0.0
        %526 = vmatprep.subr.mxu0 0.0
        %527 = vmatpush1.msra.mxu0 0.0
        %528 = vmatprep.subr.mxu0 0.0
        %529 = vmatpush1.msra.mxu0 0.0
        %530 = vmatprep.subr.mxu0 0.0
        %531 = vmatpush1.msra.mxu0 0.0
        %532 = vmatprep.subr.mxu0 0.0
        %533 = vmatpush1.msra.mxu0 0.0
        %534 = vmatprep.subr.mxu0 0.0
        %535 = vmatpush1.msra.mxu0 0.0
        %536 = vmatprep.subr.mxu0 0.0
        %537 = vmatpush1.msra.mxu0 0.0
        %538 = vmatprep.subr.mxu0 0.0
        %539 = vmatpush1.msra.mxu0 0.0
        %540 = vmatprep.subr.mxu0 0.0
        %541 = vmatpush1.msra.mxu0 0.0
        %542 = vmatprep.subr.mxu0 0.0
        %543 = vmatpush1.msra.mxu0 0.0
        %544 = vmatprep.subr.mxu0 0.0
        %545 = vmatpush1.msra.mxu0 0.0
        %546 = vmatprep.subr.mxu0 0.0
        %547 = vmatpush1.msra.mxu0 0.0
        %548 = vmatprep.subr.mxu0 0.0
        %549 = vmatpush1.msra.mxu0 0.0
        %550 = vmatprep.subr.mxu0 0.0
        %551 = vmatpush1.msra.mxu0 0.0
        %552 = vmatprep.subr.mxu0 0.0
        %553 = vmatpush1.msra.mxu0 0.0
        %554 = vmatprep.subr.mxu0 0.0
        %555 = vmatpush1.msra.mxu0 0.0
        %556 = vmatprep.subr.mxu0 0.0
        %557 = vmatpush1.msra.mxu0 0.0
        %558 = vmatprep.subr.mxu0 0.0
        %559 = vmatpush1.msra.mxu0 0.0
        %560 = vmatprep.subr.mxu0 0.0
        %561 = vmatpush1.msra.mxu0 0.0
        %562 = vmatprep.mubr.f32.mxu0 0.0
        %563 = vmatmul.mubr.f32.gmra.mrb[0].mxu0 %v496
        %v564 = vpop.f32.mrb[0].mxu0
        %v565 = vadd.f32 0.0, %v564
        %v566 = vpop.f32.mrb[0].mxu0
        %567 = vdwg.mxu0
        %568 = vst.msk [vmem:[#allocation2] sm:$0xff] %vm406, %v565
        %569 = vrot.lane.b32.xlu0 %v400, 120
        %v570 = vpop.permute.xlu0 %569
        %571 = vrot.lane.b32.xlu0 %v400, 88
        %v572 = vpop.permute.xlu0 %571
        %v573 = vsel %vm406, %v570, 0
        %v575 = vsel %vm406, %v572, 0
        %577 = vmatprep.subr.mxu0 0.0
        %578 = vmatpush1.xpose.msra.mxu0 %v575
        %579 = vmatprep.subr.mxu0 0.0
        %580 = vmatpush1.xpose.msra.mxu0 0.0
        %581 = vmatprep.subr.mxu0 0.0
        %582 = vmatpush1.xpose.msra.mxu0 0.0
        %583 = vmatprep.subr.mxu0 0.0
        %584 = vmatpush1.xpose.msra.mxu0 0.0
        %585 = vmatprep.subr.mxu0 0.0
        %586 = vmatpush1.xpose.msra.mxu0 0.0
        %587 = vmatprep.subr.mxu0 0.0
        %588 = vmatpush1.xpose.msra.mxu0 0.0
        %589 = vmatprep.subr.mxu0 0.0
        %590 = vmatpush1.xpose.msra.mxu0 0.0
        %591 = vmatprep.subr.mxu0 0.0
        %592 = vmatpush1.xpose.msra.mxu0 0.0
        %593 = vmatprep.subr.mxu0 0.0
        %594 = vmatpush1.xpose.msra.mxu0 0.0
        %595 = vmatprep.subr.mxu0 0.0
        %596 = vmatpush1.xpose.msra.mxu0 0.0
        %597 = vmatprep.subr.mxu0 0.0
        %598 = vmatpush1.xpose.msra.mxu0 0.0
        %599 = vmatprep.subr.mxu0 0.0
        %600 = vmatpush1.xpose.msra.mxu0 0.0
        %601 = vmatprep.subr.mxu0 0.0
        %602 = vmatpush1.xpose.msra.mxu0 0.0
        %603 = vmatprep.subr.mxu0 0.0
        %604 = vmatpush1.xpose.msra.mxu0 0.0
        %605 = vmatprep.subr.mxu0 0.0
        %606 = vmatpush1.xpose.msra.mxu0 0.0
        %607 = vmatprep.subr.mxu0 0.0
        %608 = vmatpush1.xpose.msra.mxu0 0.0
        %609 = vmatprep.subr.mxu0 0.0
        %610 = vmatpush1.xpose.msra.mxu0 0.0
        %611 = vmatprep.subr.mxu0 0.0
        %612 = vmatpush1.xpose.msra.mxu0 0.0
        %613 = vmatprep.subr.mxu0 0.0
        %614 = vmatpush1.xpose.msra.mxu0 0.0
        %615 = vmatprep.subr.mxu0 0.0
        %616 = vmatpush1.xpose.msra.mxu0 0.0
        %617 = vmatprep.subr.mxu0 0.0
        %618 = vmatpush1.xpose.msra.mxu0 0.0
        %619 = vmatprep.subr.mxu0 0.0
        %620 = vmatpush1.xpose.msra.mxu0 0.0
        %621 = vmatprep.subr.mxu0 0.0
        %622 = vmatpush1.xpose.msra.mxu0 0.0
        %623 = vmatprep.subr.mxu0 0.0
        %624 = vmatpush1.xpose.msra.mxu0 0.0
        %625 = vmatprep.subr.mxu0 0.0
        %626 = vmatpush1.xpose.msra.mxu0 0.0
        %627 = vmatprep.subr.mxu0 0.0
        %628 = vmatpush1.xpose.msra.mxu0 0.0
        %629 = vmatprep.subr.mxu0 0.0
        %630 = vmatpush1.xpose.msra.mxu0 0.0
        %631 = vmatprep.subr.mxu0 0.0
        %632 = vmatpush1.xpose.msra.mxu0 0.0
        %633 = vmatprep.subr.mxu0 0.0
        %634 = vmatpush1.xpose.msra.mxu0 0.0
        %635 = vmatprep.subr.mxu0 0.0
        %636 = vmatpush1.xpose.msra.mxu0 0.0
        %637 = vmatprep.subr.mxu0 0.0
        %638 = vmatpush1.xpose.msra.mxu0 0.0
        %639 = vmatprep.subr.mxu0 0.0
        %640 = vmatpush1.xpose.msra.mxu0 0.0
        %641 = vmatprep.mubr.f32.mxu0 0.0
        %642 = vmatmul.mubr.f32.gmra.mrb[0].mxu0 %v573
        %v643 = vpop.f32.mrb[0].mxu0
        %v644 = vadd.f32 0.0, %v643
        %v645 = vpop.f32.mrb[0].mxu0
        %646 = vdwg.mxu0
        %v647 = vsel %vm406, %v644, -inf
        %648 = vmax.xlane.f32.xlu0 %v647
        %v649 = vpop.xlane.xlu0 %648
        %v650 = vsub.f32 %v644, %v649
        %v651 = vmul.f32 %v650, 1.442695
        %v652 = vpow.pop %v651
        %v653 = vsel %vm406, %v652, 0.0
        %654 = vadd.xlane.f32.xlu0 %v653
        %v655 = vpop.xlane.xlu0 %654
        %v656 = vrcp.pop %v655
        %v657 = vmul.f32 %v652, %v656
        %658 = vrot.lane.b32.xlu0 %v400, 56
        %v659 = vpop.permute.xlu0 %658
        %v662 = vsel %vm406, %v657, 0
        %664 = vmatprep.subr.mxu0 0.0
        %665 = vmatpush1.msra.mxu0 %v659
        %666 = vmatprep.subr.mxu0 0.0
        %667 = vmatpush1.msra.mxu0 0.0
        %668 = vmatprep.subr.mxu0 0.0
        %669 = vmatpush1.msra.mxu0 0.0
        %670 = vmatprep.subr.mxu0 0.0
        %671 = vmatpush1.msra.mxu0 0.0
        %672 = vmatprep.subr.mxu0 0.0
        %673 = vmatpush1.msra.mxu0 0.0
        %674 = vmatprep.subr.mxu0 0.0
        %675 = vmatpush1.msra.mxu0 0.0
        %676 = vmatprep.subr.mxu0 0.0
        %677 = vmatpush1.msra.mxu0 0.0
        %678 = vmatprep.subr.mxu0 0.0
        %679 = vmatpush1.msra.mxu0 0.0
        %680 = vmatprep.subr.mxu0 0.0
        %681 = vmatpush1.msra.mxu0 0.0
        %682 = vmatprep.subr.mxu0 0.0
        %683 = vmatpush1.msra.mxu0 0.0
        %684 = vmatprep.subr.mxu0 0.0
        %685 = vmatpush1.msra.mxu0 0.0
        %686 = vmatprep.subr.mxu0 0.0
        %687 = vmatpush1.msra.mxu0 0.0
        %688 = vmatprep.subr.mxu0 0.0
        %689 = vmatpush1.msra.mxu0 0.0
        %690 = vmatprep.subr.mxu0 0.0
        %691 = vmatpush1.msra.mxu0 0.0
        %692 = vmatprep.subr.mxu0 0.0
        %693 = vmatpush1.msra.mxu0 0.0
        %694 = vmatprep.subr.mxu0 0.0
        %695 = vmatpush1.msra.mxu0 0.0
        %696 = vmatprep.subr.mxu0 0.0
        %697 = vmatpush1.msra.mxu0 0.0
        %698 = vmatprep.subr.mxu0 0.0
        %699 = vmatpush1.msra.mxu0 0.0
        %700 = vmatprep.subr.mxu0 0.0
        %701 = vmatpush1.msra.mxu0 0.0
        %702 = vmatprep.subr.mxu0 0.0
        %703 = vmatpush1.msra.mxu0 0.0
        %704 = vmatprep.subr.mxu0 0.0
        %705 = vmatpush1.msra.mxu0 0.0
        %706 = vmatprep.subr.mxu0 0.0
        %707 = vmatpush1.msra.mxu0 0.0
        %708 = vmatprep.subr.mxu0 0.0
        %709 = vmatpush1.msra.mxu0 0.0
        %710 = vmatprep.subr.mxu0 0.0
        %711 = vmatpush1.msra.mxu0 0.0
        %712 = vmatprep.subr.mxu0 0.0
        %713 = vmatpush1.msra.mxu0 0.0
        %714 = vmatprep.subr.mxu0 0.0
        %715 = vmatpush1.msra.mxu0 0.0
        %716 = vmatprep.subr.mxu0 0.0
        %717 = vmatpush1.msra.mxu0 0.0
        %718 = vmatprep.subr.mxu0 0.0
        %719 = vmatpush1.msra.mxu0 0.0
        %720 = vmatprep.subr.mxu0 0.0
        %721 = vmatpush1.msra.mxu0 0.0
        %722 = vmatprep.subr.mxu0 0.0
        %723 = vmatpush1.msra.mxu0 0.0
        %724 = vmatprep.subr.mxu0 0.0
        %725 = vmatpush1.msra.mxu0 0.0
        %726 = vmatprep.subr.mxu0 0.0
        %727 = vmatpush1.msra.mxu0 0.0
        %728 = vmatprep.mubr.f32.mxu0 0.0
        %729 = vmatmul.mubr.f32.gmra.mrb[0].mxu0 %v662
        %v730 = vpop.f32.mrb[0].mxu0
        %v731 = vadd.f32 0.0, %v730
        %v732 = vpop.f32.mrb[0].mxu0
        %733 = vdwg.mxu0
        %735 = vrot.lane.b32.xlu0 %v731, 8
        %v736 = vpop.permute.xlu0 %735
        %vm738 = vcmask 130112
        %739 = vst.msk [vmem:[#allocation2] sm:$0xff] %vm738, %v736
        %740 = vrot.lane.b32.xlu0 %v400, 112
        %v741 = vpop.permute.xlu0 %740
        %742 = vrot.lane.b32.xlu0 %v400, 80
        %v743 = vpop.permute.xlu0 %742
        %v744 = vsel %vm406, %v741, 0
        %v746 = vsel %vm406, %v743, 0
        %748 = vmatprep.subr.mxu0 0.0
        %749 = vmatpush1.xpose.msra.mxu0 %v746
        %750 = vmatprep.subr.mxu0 0.0
        %751 = vmatpush1.xpose.msra.mxu0 0.0
        %752 = vmatprep.subr.mxu0 0.0
        %753 = vmatpush1.xpose.msra.mxu0 0.0
        %754 = vmatprep.subr.mxu0 0.0
        %755 = vmatpush1.xpose.msra.mxu0 0.0
        %756 = vmatprep.subr.mxu0 0.0
        %757 = vmatpush1.xpose.msra.mxu0 0.0
        %758 = vmatprep.subr.mxu0 0.0
        %759 = vmatpush1.xpose.msra.mxu0 0.0
        %760 = vmatprep.subr.mxu0 0.0
        %761 = vmatpush1.xpose.msra.mxu0 0.0
        %762 = vmatprep.subr.mxu0 0.0
        %763 = vmatpush1.xpose.msra.mxu0 0.0
        %764 = vmatprep.subr.mxu0 0.0
        %765 = vmatpush1.xpose.msra.mxu0 0.0
        %766 = vmatprep.subr.mxu0 0.0
        %767 = vmatpush1.xpose.msra.mxu0 0.0
        %768 = vmatprep.subr.mxu0 0.0
        %769 = vmatpush1.xpose.msra.mxu0 0.0
        %770 = vmatprep.subr.mxu0 0.0
        %771 = vmatpush1.xpose.msra.mxu0 0.0
        %772 = vmatprep.subr.mxu0 0.0
        %773 = vmatpush1.xpose.msra.mxu0 0.0
        %774 = vmatprep.subr.mxu0 0.0
        %775 = vmatpush1.xpose.msra.mxu0 0.0
        %776 = vmatprep.subr.mxu0 0.0
        %777 = vmatpush1.xpose.msra.mxu0 0.0
        %778 = vmatprep.subr.mxu0 0.0
        %779 = vmatpush1.xpose.msra.mxu0 0.0
        %780 = vmatprep.subr.mxu0 0.0
        %781 = vmatpush1.xpose.msra.mxu0 0.0
        %782 = vmatprep.subr.mxu0 0.0
        %783 = vmatpush1.xpose.msra.mxu0 0.0
        %784 = vmatprep.subr.mxu0 0.0
        %785 = vmatpush1.xpose.msra.mxu0 0.0
        %786 = vmatprep.subr.mxu0 0.0
        %787 = vmatpush1.xpose.msra.mxu0 0.0
        %788 = vmatprep.subr.mxu0 0.0
        %789 = vmatpush1.xpose.msra.mxu0 0.0
        %790 = vmatprep.subr.mxu0 0.0
        %791 = vmatpush1.xpose.msra.mxu0 0.0
        %792 = vmatprep.subr.mxu0 0.0
        %793 = vmatpush1.xpose.msra.mxu0 0.0
        %794 = vmatprep.subr.mxu0 0.0
        %795 = vmatpush1.xpose.msra.mxu0 0.0
        %796 = vmatprep.subr.mxu0 0.0
        %797 = vmatpush1.xpose.msra.mxu0 0.0
        %798 = vmatprep.subr.mxu0 0.0
        %799 = vmatpush1.xpose.msra.mxu0 0.0
        %800 = vmatprep.subr.mxu0 0.0
        %801 = vmatpush1.xpose.msra.mxu0 0.0
        %802 = vmatprep.subr.mxu0 0.0
        %803 = vmatpush1.xpose.msra.mxu0 0.0
        %804 = vmatprep.subr.mxu0 0.0
        %805 = vmatpush1.xpose.msra.mxu0 0.0
        %806 = vmatprep.subr.mxu0 0.0
        %807 = vmatpush1.xpose.msra.mxu0 0.0
        %808 = vmatprep.subr.mxu0 0.0
        %809 = vmatpush1.xpose.msra.mxu0 0.0
        %810 = vmatprep.subr.mxu0 0.0
        %811 = vmatpush1.xpose.msra.mxu0 0.0
        %812 = vmatprep.mubr.f32.mxu0 0.0
        %813 = vmatmul.mubr.f32.gmra.mrb[0].mxu0 %v744
        %v814 = vpop.f32.mrb[0].mxu0
        %v815 = vadd.f32 0.0, %v814
        %v816 = vpop.f32.mrb[0].mxu0
        %817 = vdwg.mxu0
        %v818 = vsel %vm406, %v815, -inf
        %819 = vmax.xlane.f32.xlu0 %v818
        %v820 = vpop.xlane.xlu0 %819
        %v821 = vsub.f32 %v815, %v820
        %v822 = vmul.f32 %v821, 1.442695
        %v823 = vpow.pop %v822
        %v824 = vsel %vm406, %v823, 0.0
        %825 = vadd.xlane.f32.xlu0 %v824
        %v826 = vpop.xlane.xlu0 %825
        %v827 = vrcp.pop %v826
        %v828 = vmul.f32 %v823, %v827
        %829 = vrot.lane.b32.xlu0 %v400, 48
        %v830 = vpop.permute.xlu0 %829
        %v833 = vsel %vm406, %v828, 0
        %835 = vmatprep.subr.mxu0 0.0
        %836 = vmatpush1.msra.mxu0 %v830
        %837 = vmatprep.subr.mxu0 0.0
        %838 = vmatpush1.msra.mxu0 0.0
        %839 = vmatprep.subr.mxu0 0.0
        %840 = vmatpush1.msra.mxu0 0.0
        %841 = vmatprep.subr.mxu0 0.0
        %842 = vmatpush1.msra.mxu0 0.0
        %843 = vmatprep.subr.mxu0 0.0
        %844 = vmatpush1.msra.mxu0 0.0
        %845 = vmatprep.subr.mxu0 0.0
        %846 = vmatpush1.msra.mxu0 0.0
        %847 = vmatprep.subr.mxu0 0.0
        %848 = vmatpush1.msra.mxu0 0.0
        %849 = vmatprep.subr.mxu0 0.0
        %850 = vmatpush1.msra.mxu0 0.0
        %851 = vmatprep.subr.mxu0 0.0
        %852 = vmatpush1.msra.mxu0 0.0
        %853 = vmatprep.subr.mxu0 0.0
        %854 = vmatpush1.msra.mxu0 0.0
        %855 = vmatprep.subr.mxu0 0.0
        %856 = vmatpush1.msra.mxu0 0.0
        %857 = vmatprep.subr.mxu0 0.0
        %858 = vmatpush1.msra.mxu0 0.0
        %859 = vmatprep.subr.mxu0 0.0
        %860 = vmatpush1.msra.mxu0 0.0
        %861 = vmatprep.subr.mxu0 0.0
        %862 = vmatpush1.msra.mxu0 0.0
        %863 = vmatprep.subr.mxu0 0.0
        %864 = vmatpush1.msra.mxu0 0.0
        %865 = vmatprep.subr.mxu0 0.0
        %866 = vmatpush1.msra.mxu0 0.0
        %867 = vmatprep.subr.mxu0 0.0
        %868 = vmatpush1.msra.mxu0 0.0
        %869 = vmatprep.subr.mxu0 0.0
        %870 = vmatpush1.msra.mxu0 0.0
        %871 = vmatprep.subr.mxu0 0.0
        %872 = vmatpush1.msra.mxu0 0.0
        %873 = vmatprep.subr.mxu0 0.0
        %874 = vmatpush1.msra.mxu0 0.0
        %875 = vmatprep.subr.mxu0 0.0
        %876 = vmatpush1.msra.mxu0 0.0
        %877 = vmatprep.subr.mxu0 0.0
        %878 = vmatpush1.msra.mxu0 0.0
        %879 = vmatprep.subr.mxu0 0.0
        %880 = vmatpush1.msra.mxu0 0.0
        %881 = vmatprep.subr.mxu0 0.0
        %882 = vmatpush1.msra.mxu0 0.0
        %883 = vmatprep.subr.mxu0 0.0
        %884 = vmatpush1.msra.mxu0 0.0
        %885 = vmatprep.subr.mxu0 0.0
        %886 = vmatpush1.msra.mxu0 0.0
        %887 = vmatprep.subr.mxu0 0.0
        %888 = vmatpush1.msra.mxu0 0.0
        %889 = vmatprep.subr.mxu0 0.0
        %890 = vmatpush1.msra.mxu0 0.0
        %891 = vmatprep.subr.mxu0 0.0
        %892 = vmatpush1.msra.mxu0 0.0
        %893 = vmatprep.subr.mxu0 0.0
        %894 = vmatpush1.msra.mxu0 0.0
        %895 = vmatprep.subr.mxu0 0.0
        %896 = vmatpush1.msra.mxu0 0.0
        %897 = vmatprep.subr.mxu0 0.0
        %898 = vmatpush1.msra.mxu0 0.0
        %899 = vmatprep.mubr.f32.mxu0 0.0
        %900 = vmatmul.mubr.f32.gmra.mrb[0].mxu0 %v833
        %v901 = vpop.f32.mrb[0].mxu0
        %v902 = vadd.f32 0.0, %v901
        %v903 = vpop.f32.mrb[0].mxu0
        %904 = vdwg.mxu0
        %906 = vrot.lane.b32.xlu0 %v902, 16
        %v907 = vpop.permute.xlu0 %906
        %vm909 = vcmask 195712
        %910 = vst.msk [vmem:[#allocation2] sm:$0xff] %vm909, %v907
        %911 = vrot.lane.b32.xlu0 %v400, 104
        %v912 = vpop.permute.xlu0 %911
        %913 = vrot.lane.b32.xlu0 %v400, 72
        %v914 = vpop.permute.xlu0 %913
        %v915 = vsel %vm406, %v912, 0
        %v917 = vsel %vm406, %v914, 0
        %919 = vmatprep.subr.mxu0 0.0
        %920 = vmatpush1.xpose.msra.mxu0 %v917
        %921 = vmatprep.subr.mxu0 0.0
        %922 = vmatpush1.xpose.msra.mxu0 0.0
        %923 = vmatprep.subr.mxu0 0.0
        %924 = vmatpush1.xpose.msra.mxu0 0.0
        %925 = vmatprep.subr.mxu0 0.0
        %926 = vmatpush1.xpose.msra.mxu0 0.0
        %927 = vmatprep.subr.mxu0 0.0
        %928 = vmatpush1.xpose.msra.mxu0 0.0
        %929 = vmatprep.subr.mxu0 0.0
        %930 = vmatpush1.xpose.msra.mxu0 0.0
        %931 = vmatprep.subr.mxu0 0.0
        %932 = vmatpush1.xpose.msra.mxu0 0.0
        %933 = vmatprep.subr.mxu0 0.0
        %934 = vmatpush1.xpose.msra.mxu0 0.0
        %935 = vmatprep.subr.mxu0 0.0
        %936 = vmatpush1.xpose.msra.mxu0 0.0
        %937 = vmatprep.subr.mxu0 0.0
        %938 = vmatpush1.xpose.msra.mxu0 0.0
        %939 = vmatprep.subr.mxu0 0.0
        %940 = vmatpush1.xpose.msra.mxu0 0.0
        %941 = vmatprep.subr.mxu0 0.0
        %942 = vmatpush1.xpose.msra.mxu0 0.0
        %943 = vmatprep.subr.mxu0 0.0
        %944 = vmatpush1.xpose.msra.mxu0 0.0
        %945 = vmatprep.subr.mxu0 0.0
        %946 = vmatpush1.xpose.msra.mxu0 0.0
        %947 = vmatprep.subr.mxu0 0.0
        %948 = vmatpush1.xpose.msra.mxu0 0.0
        %949 = vmatprep.subr.mxu0 0.0
        %950 = vmatpush1.xpose.msra.mxu0 0.0
        %951 = vmatprep.subr.mxu0 0.0
        %952 = vmatpush1.xpose.msra.mxu0 0.0
        %953 = vmatprep.subr.mxu0 0.0
        %954 = vmatpush1.xpose.msra.mxu0 0.0
        %955 = vmatprep.subr.mxu0 0.0
        %956 = vmatpush1.xpose.msra.mxu0 0.0
        %957 = vmatprep.subr.mxu0 0.0
        %958 = vmatpush1.xpose.msra.mxu0 0.0
        %959 = vmatprep.subr.mxu0 0.0
        %960 = vmatpush1.xpose.msra.mxu0 0.0
        %961 = vmatprep.subr.mxu0 0.0
        %962 = vmatpush1.xpose.msra.mxu0 0.0
        %963 = vmatprep.subr.mxu0 0.0
        %964 = vmatpush1.xpose.msra.mxu0 0.0
        %965 = vmatprep.subr.mxu0 0.0
        %966 = vmatpush1.xpose.msra.mxu0 0.0
        %967 = vmatprep.subr.mxu0 0.0
        %968 = vmatpush1.xpose.msra.mxu0 0.0
        %969 = vmatprep.subr.mxu0 0.0
        %970 = vmatpush1.xpose.msra.mxu0 0.0
        %971 = vmatprep.subr.mxu0 0.0
        %972 = vmatpush1.xpose.msra.mxu0 0.0
        %973 = vmatprep.subr.mxu0 0.0
        %974 = vmatpush1.xpose.msra.mxu0 0.0
        %975 = vmatprep.subr.mxu0 0.0
        %976 = vmatpush1.xpose.msra.mxu0 0.0
        %977 = vmatprep.subr.mxu0 0.0
        %978 = vmatpush1.xpose.msra.mxu0 0.0
        %979 = vmatprep.subr.mxu0 0.0
        %980 = vmatpush1.xpose.msra.mxu0 0.0
        %981 = vmatprep.subr.mxu0 0.0
        %982 = vmatpush1.xpose.msra.mxu0 0.0
        %983 = vmatprep.mubr.f32.mxu0 0.0
        %984 = vmatmul.mubr.f32.gmra.mrb[0].mxu0 %v915
        %v985 = vpop.f32.mrb[0].mxu0
        %v986 = vadd.f32 0.0, %v985
        %v987 = vpop.f32.mrb[0].mxu0
        %988 = vdwg.mxu0
        %v989 = vsel %vm406, %v986, -inf
        %990 = vmax.xlane.f32.xlu0 %v989
        %v991 = vpop.xlane.xlu0 %990
        %v992 = vsub.f32 %v986, %v991
        %v993 = vmul.f32 %v992, 1.442695
        %v994 = vpow.pop %v993
        %v995 = vsel %vm406, %v994, 0.0
        %996 = vadd.xlane.f32.xlu0 %v995
        %v997 = vpop.xlane.xlu0 %996
        %v998 = vrcp.pop %v997
        %v999 = vmul.f32 %v994, %v998
        %1000 = vrot.lane.b32.xlu0 %v400, 40
        %v1001 = vpop.permute.xlu0 %1000
        %v1004 = vsel %vm406, %v999, 0
        %1006 = vmatprep.subr.mxu0 0.0
        %1007 = vmatpush1.msra.mxu0 %v1001
        %1008 = vmatprep.subr.mxu0 0.0
        %1009 = vmatpush1.msra.mxu0 0.0
        %1010 = vmatprep.subr.mxu0 0.0
        %1011 = vmatpush1.msra.mxu0 0.0
        %1012 = vmatprep.subr.mxu0 0.0
        %1013 = vmatpush1.msra.mxu0 0.0
        %1014 = vmatprep.subr.mxu0 0.0
        %1015 = vmatpush1.msra.mxu0 0.0
        %1016 = vmatprep.subr.mxu0 0.0
        %1017 = vmatpush1.msra.mxu0 0.0
        %1018 = vmatprep.subr.mxu0 0.0
        %1019 = vmatpush1.msra.mxu0 0.0
        %1020 = vmatprep.subr.mxu0 0.0
        %1021 = vmatpush1.msra.mxu0 0.0
        %1022 = vmatprep.subr.mxu0 0.0
        %1023 = vmatpush1.msra.mxu0 0.0
        %1024 = vmatprep.subr.mxu0 0.0
        %1025 = vmatpush1.msra.mxu0 0.0
        %1026 = vmatprep.subr.mxu0 0.0
        %1027 = vmatpush1.msra.mxu0 0.0
        %1028 = vmatprep.subr.mxu0 0.0
        %1029 = vmatpush1.msra.mxu0 0.0
        %1030 = vmatprep.subr.mxu0 0.0
        %1031 = vmatpush1.msra.mxu0 0.0
        %1032 = vmatprep.subr.mxu0 0.0
        %1033 = vmatpush1.msra.mxu0 0.0
        %1034 = vmatprep.subr.mxu0 0.0
        %1035 = vmatpush1.msra.mxu0 0.0
        %1036 = vmatprep.subr.mxu0 0.0
        %1037 = vmatpush1.msra.mxu0 0.0
        %1038 = vmatprep.subr.mxu0 0.0
        %1039 = vmatpush1.msra.mxu0 0.0
        %1040 = vmatprep.subr.mxu0 0.0
        %1041 = vmatpush1.msra.mxu0 0.0
        %1042 = vmatprep.subr.mxu0 0.0
        %1043 = vmatpush1.msra.mxu0 0.0
        %1044 = vmatprep.subr.mxu0 0.0
        %1045 = vmatpush1.msra.mxu0 0.0
        %1046 = vmatprep.subr.mxu0 0.0
        %1047 = vmatpush1.msra.mxu0 0.0
        %1048 = vmatprep.subr.mxu0 0.0
        %1049 = vmatpush1.msra.mxu0 0.0
        %1050 = vmatprep.subr.mxu0 0.0
        %1051 = vmatpush1.msra.mxu0 0.0
        %1052 = vmatprep.subr.mxu0 0.0
        %1053 = vmatpush1.msra.mxu0 0.0
        %1054 = vmatprep.subr.mxu0 0.0
        %1055 = vmatpush1.msra.mxu0 0.0
        %1056 = vmatprep.subr.mxu0 0.0
        %1057 = vmatpush1.msra.mxu0 0.0
        %1058 = vmatprep.subr.mxu0 0.0
        %1059 = vmatpush1.msra.mxu0 0.0
        %1060 = vmatprep.subr.mxu0 0.0
        %1061 = vmatpush1.msra.mxu0 0.0
        %1062 = vmatprep.subr.mxu0 0.0
        %1063 = vmatpush1.msra.mxu0 0.0
        %1064 = vmatprep.subr.mxu0 0.0
        %1065 = vmatpush1.msra.mxu0 0.0
        %1066 = vmatprep.subr.mxu0 0.0
        %1067 = vmatpush1.msra.mxu0 0.0
        %1068 = vmatprep.subr.mxu0 0.0
        %1069 = vmatpush1.msra.mxu0 0.0
        %1070 = vmatprep.mubr.f32.mxu0 0.0
        %1071 = vmatmul.mubr.f32.gmra.mrb[0].mxu0 %v1004
        %v1072 = vpop.f32.mrb[0].mxu0
        %v1073 = vadd.f32 0.0, %v1072
        %v1074 = vpop.f32.mrb[0].mxu0
        %1075 = vdwg.mxu0
        %1077 = vrot.lane.b32.xlu0 %v1073, 24
        %v1078 = vpop.permute.xlu0 %1077
        %vm1080 = vcmask 261312
        %1081 = vst.msk [vmem:[#allocation2] sm:$0xff] %vm1080, %v1078
        %v1082 = vld [vmem:[#allocation2] sm:$0xff]
        %v1083 = vld [vmem:[%s2] sm:$0xff]
        %v1084 = vld [vmem:[%s2 + $0x8] sm:$0xff]
        %v1085 = vld [vmem:[%s2 + $0x10] sm:$0xff]
        %v1086 = vld [vmem:[%s2 + $0x18] sm:$0xff]
        %v1087 = vlaneseq
        %v1088 = vshrl.u32 %v1087, 7
        %v1089 = vsub.s32 0, %v1088
        %v1090 = vrot.slane %v316, %v1089
        %v1092 = vsel %vm329, %v1082, 0
        %1094 = vmatprep.subr.mxu0 0.0
        %1095 = vmatpush1.msra.mxu0 %v1083
        %1096 = vmatprep.subr.mxu0 0.0
        %1097 = vmatpush1.msra.mxu0 %v1084
        %1098 = vmatprep.subr.mxu0 0.0
        %1099 = vmatpush1.msra.mxu0 %v1085
        %1100 = vmatprep.subr.mxu0 0.0
        %1101 = vmatpush1.msra.mxu0 %v1086
        %1102 = vmatprep.subr.mxu0 0.0
        %1103 = vmatpush1.msra.mxu0 0.0
        %1104 = vmatprep.subr.mxu0 0.0
        %1105 = vmatpush1.msra.mxu0 0.0
        %1106 = vmatprep.subr.mxu0 0.0
        %1107 = vmatpush1.msra.mxu0 0.0
        %1108 = vmatprep.subr.mxu0 0.0
        %1109 = vmatpush1.msra.mxu0 0.0
        %1110 = vmatprep.subr.mxu0 0.0
        %1111 = vmatpush1.msra.mxu0 0.0
        %1112 = vmatprep.subr.mxu0 0.0
        %1113 = vmatpush1.msra.mxu0 0.0
        %1114 = vmatprep.subr.mxu0 0.0
        %1115 = vmatpush1.msra.mxu0 0.0
        %1116 = vmatprep.subr.mxu0 0.0
        %1117 = vmatpush1.msra.mxu0 0.0
        %1118 = vmatprep.subr.mxu0 0.0
        %1119 = vmatpush1.msra.mxu0 0.0
        %1120 = vmatprep.subr.mxu0 0.0
        %1121 = vmatpush1.msra.mxu0 0.0
        %1122 = vmatprep.subr.mxu0 0.0
        %1123 = vmatpush1.msra.mxu0 0.0
        %1124 = vmatprep.subr.mxu0 0.0
        %1125 = vmatpush1.msra.mxu0 0.0
        %1126 = vmatprep.subr.mxu0 0.0
        %1127 = vmatpush1.msra.mxu0 0.0
        %1128 = vmatprep.subr.mxu0 0.0
        %1129 = vmatpush1.msra.mxu0 0.0
        %1130 = vmatprep.subr.mxu0 0.0
        %1131 = vmatpush1.msra.mxu0 0.0
        %1132 = vmatprep.subr.mxu0 0.0
        %1133 = vmatpush1.msra.mxu0 0.0
        %1134 = vmatprep.subr.mxu0 0.0
        %1135 = vmatpush1.msra.mxu0 0.0
        %1136 = vmatprep.subr.mxu0 0.0
        %1137 = vmatpush1.msra.mxu0 0.0
        %1138 = vmatprep.subr.mxu0 0.0
        %1139 = vmatpush1.msra.mxu0 0.0
        %1140 = vmatprep.subr.mxu0 0.0
        %1141 = vmatpush1.msra.mxu0 0.0
        %1142 = vmatprep.subr.mxu0 0.0
        %1143 = vmatpush1.msra.mxu0 0.0
        %1144 = vmatprep.subr.mxu0 0.0
        %1145 = vmatpush1.msra.mxu0 0.0
        %1146 = vmatprep.subr.mxu0 0.0
        %1147 = vmatpush1.msra.mxu0 0.0
        %1148 = vmatprep.subr.mxu0 0.0
        %1149 = vmatpush1.msra.mxu0 0.0
        %1150 = vmatprep.subr.mxu0 0.0
        %1151 = vmatpush1.msra.mxu0 0.0
        %1152 = vmatprep.subr.mxu0 0.0
        %1153 = vmatpush1.msra.mxu0 0.0
        %1154 = vmatprep.subr.mxu0 0.0
        %1155 = vmatpush1.msra.mxu0 0.0
        %1156 = vmatprep.subr.mxu0 0.0
        %1157 = vmatpush1.msra.mxu0 0.0
        %1158 = vmatprep.mubr.f32.mxu0 0.0
        %1159 = vmatmul.mubr.f32.gmra.mrb[0].mxu0 %v1092
        %v1160 = vpop.f32.mrb[0].mxu0
        %v1161 = vadd.f32 %v1090, %v1160
        %v1162 = vpop.f32.mrb[0].mxu0
        %1163 = vdwg.mxu0
        %v1164 = vadd.f32 %v317, %v1161
        %v1165 = vsel %vm329, %v1164, 0.0
        %1166 = vadd.xlane.f32.xlu0 %v1165
        %v1167 = vpop.xlane.xlu0 %1166
        %v1168 = vrcp.pop 32.0
        %v1169 = vmul.f32 %v1167, %v1168
        %v1170 = vsub.f32 %v1164, %v1169
        %v1171 = vmul.f32 %v1170, %v1170
        %v1172 = vsel %vm329, %v1171, 0.0
        %1173 = vadd.xlane.f32.xlu0 %v1172
        %v1174 = vpop.xlane.xlu0 %1173
        %v1175 = vmul.f32 %v1174, %v1168
        %v1176 = vadd.f32 %v1175, 1e-05
        %v1177 = vrsqrt.pop %v1176
        %v1178 = vmul.f32 %v1170, %v1177
        %v1179 = vlaneseq
        %v1180 = vshrl.u32 %v1179, 7
        %v1181 = vsub.s32 2, %v1180
        %v1182 = vrot.slane %v316, %v1181
        %v1183 = vmul.f32 %v1178, %v1182
        %v1184 = vlaneseq
        %v1185 = vshrl.u32 %v1184, 7
        %v1186 = vsub.s32 3, %v1185
        %v1187 = vrot.slane %v316, %v1186
        %v1188 = vadd.f32 %v1183, %v1187
        %v1189 = vld [vmem:[#allocation3] sm:$0xff]
        %v1190 = vld [vmem:[#allocation3 + $0x8] sm:$0xff]
        %v1191 = vld [vmem:[#allocation3 + $0x10] sm:$0xff]
        %v1192 = vld [vmem:[#allocation3 + $0x18] sm:$0xff]
        %v1193 = vld [vmem:[%s6] sm:$0x1]
        %v1195 = vlaneseq
        %v1196 = vshrl.u32 %v1195, 7
        %v1197 = vsub.s32 0, %v1196
        %v1198 = vrot.slane %v1193, %v1197
        %v1201 = vsel %vm329, %v1188, 0
        %1203 = vmatprep.subr.mxu0 0.0
        %1204 = vmatpush1.msra.mxu0 %v1189
        %1205 = vmatprep.subr.mxu0 0.0
        %1206 = vmatpush1.msra.mxu0 %v1190
        %1207 = vmatprep.subr.mxu0 0.0
        %1208 = vmatpush1.msra.mxu0 %v1191
        %1209 = vmatprep.subr.mxu0 0.0
        %1210 = vmatpush1.msra.mxu0 %v1192
        %1211 = vmatprep.subr.mxu0 0.0
        %1212 = vmatpush1.msra.mxu0 0.0
        %1213 = vmatprep.subr.mxu0 0.0
        %1214 = vmatpush1.msra.mxu0 0.0
        %1215 = vmatprep.subr.mxu0 0.0
        %1216 = vmatpush1.msra.mxu0 0.0
        %1217 = vmatprep.subr.mxu0 0.0
        %1218 = vmatpush1.msra.mxu0 0.0
        %1219 = vmatprep.subr.mxu0 0.0
        %1220 = vmatpush1.msra.mxu0 0.0
        %1221 = vmatprep.subr.mxu0 0.0
        %1222 = vmatpush1.msra.mxu0 0.0
        %1223 = vmatprep.subr.mxu0 0.0
        %1224 = vmatpush1.msra.mxu0 0.0
        %1225 = vmatprep.subr.mxu0 0.0
        %1226 = vmatpush1.msra.mxu0 0.0
        %1227 = vmatprep.subr.mxu0 0.0
        %1228 = vmatpush1.msra.mxu0 0.0
        %1229 = vmatprep.subr.mxu0 0.0
        %1230 = vmatpush1.msra.mxu0 0.0
        %1231 = vmatprep.subr.mxu0 0.0
        %1232 = vmatpush1.msra.mxu0 0.0
        %1233 = vmatprep.subr.mxu0 0.0
        %1234 = vmatpush1.msra.mxu0 0.0
        %1235 = vmatprep.subr.mxu0 0.0
        %1236 = vmatpush1.msra.mxu0 0.0
        %1237 = vmatprep.subr.mxu0 0.0
        %1238 = vmatpush1.msra.mxu0 0.0
        %1239 = vmatprep.subr.mxu0 0.0
        %1240 = vmatpush1.msra.mxu0 0.0
        %1241 = vmatprep.subr.mxu0 0.0
        %1242 = vmatpush1.msra.mxu0 0.0
        %1243 = vmatprep.subr.mxu0 0.0
        %1244 = vmatpush1.msra.mxu0 0.0
        %1245 = vmatprep.subr.mxu0 0.0
        %1246 = vmatpush1.msra.mxu0 0.0
        %1247 = vmatprep.subr.mxu0 0.0
        %1248 = vmatpush1.msra.mxu0 0.0
        %1249 = vmatprep.subr.mxu0 0.0
        %1250 = vmatpush1.msra.mxu0 0.0
        %1251 = vmatprep.subr.mxu0 0.0
        %1252 = vmatpush1.msra.mxu0 0.0
        %1253 = vmatprep.subr.mxu0 0.0
        %1254 = vmatpush1.msra.mxu0 0.0
        %1255 = vmatprep.subr.mxu0 0.0
        %1256 = vmatpush1.msra.mxu0 0.0
        %1257 = vmatprep.subr.mxu0 0.0
        %1258 = vmatpush1.msra.mxu0 0.0
        %1259 = vmatprep.subr.mxu0 0.0
        %1260 = vmatpush1.msra.mxu0 0.0
        %1261 = vmatprep.subr.mxu0 0.0
        %1262 = vmatpush1.msra.mxu0 0.0
        %1263 = vmatprep.subr.mxu0 0.0
        %1264 = vmatpush1.msra.mxu0 0.0
        %1265 = vmatprep.subr.mxu0 0.0
        %1266 = vmatpush1.msra.mxu0 0.0
        %1267 = vmatprep.mubr.f32.mxu0 0.0
        %1268 = vmatmul.mubr.f32.gmra.mrb[0].mxu0 %v1201
        %v1269 = vpop.f32.mrb[0].mxu0
        %v1270 = vadd.f32 %v1198, %v1269
        %v1271 = vpop.f32.mrb[0].mxu0
        %1272 = vdwg.mxu0
        %v1273 = vmax.f32 %v1270, 0.0
        %v1274 = vld [vmem:[%s4] sm:$0xff]
        %v1275 = vld [vmem:[%s4 + $0x8] sm:$0xff]
        %v1276 = vld [vmem:[%s4 + $0x10] sm:$0xff]
        %v1277 = vld [vmem:[%s4 + $0x18] sm:$0xff]
        %v1278 = vld [vmem:[%s4 + $0x20] sm:$0xff]
        %v1279 = vld [vmem:[%s4 + $0x28] sm:$0xff]
        %v1280 = vld [vmem:[%s4 + $0x30] sm:$0xff]
        %v1281 = vld [vmem:[%s4 + $0x38] sm:$0xff]
        %v1282 = vlaneseq
        %v1283 = vshrl.u32 %v1282, 7
        %v1284 = vsub.s32 1, %v1283
        %v1285 = vrot.slane %v316, %v1284
        %vm1286 = vcmask 523264
        %v1288 = vsel %vm1286, %v1273, 0
        %1290 = vmatprep.subr.mxu0 0.0
        %1291 = vmatpush1.msra.mxu0 %v1274
        %1292 = vmatprep.subr.mxu0 0.0
        %1293 = vmatpush1.msra.mxu0 %v1275
        %1294 = vmatprep.subr.mxu0 0.0
        %1295 = vmatpush1.msra.mxu0 %v1276
        %1296 = vmatprep.subr.mxu0 0.0
        %1297 = vmatpush1.msra.mxu0 %v1277
        %1298 = vmatprep.subr.mxu0 0.0
        %1299 = vmatpush1.msra.mxu0 %v1278
        %1300 = vmatprep.subr.mxu0 0.0
        %1301 = vmatpush1.msra.mxu0 %v1279
        %1302 = vmatprep.subr.mxu0 0.0
        %1303 = vmatpush1.msra.mxu0 %v1280
        %1304 = vmatprep.subr.mxu0 0.0
        %1305 = vmatpush1.msra.mxu0 %v1281
        %1306 = vmatprep.subr.mxu0 0.0
        %1307 = vmatpush1.msra.mxu0 0.0
        %1308 = vmatprep.subr.mxu0 0.0
        %1309 = vmatpush1.msra.mxu0 0.0
        %1310 = vmatprep.subr.mxu0 0.0
        %1311 = vmatpush1.msra.mxu0 0.0
        %1312 = vmatprep.subr.mxu0 0.0
        %1313 = vmatpush1.msra.mxu0 0.0
        %1314 = vmatprep.subr.mxu0 0.0
        %1315 = vmatpush1.msra.mxu0 0.0
        %1316 = vmatprep.subr.mxu0 0.0
        %1317 = vmatpush1.msra.mxu0 0.0
        %1318 = vmatprep.subr.mxu0 0.0
        %1319 = vmatpush1.msra.mxu0 0.0
        %1320 = vmatprep.subr.mxu0 0.0
        %1321 = vmatpush1.msra.mxu0 0.0
        %1322 = vmatprep.subr.mxu0 0.0
        %1323 = vmatpush1.msra.mxu0 0.0
        %1324 = vmatprep.subr.mxu0 0.0
        %1325 = vmatpush1.msra.mxu0 0.0
        %1326 = vmatprep.subr.mxu0 0.0
        %1327 = vmatpush1.msra.mxu0 0.0
        %1328 = vmatprep.subr.mxu0 0.0
        %1329 = vmatpush1.msra.mxu0 0.0
        %1330 = vmatprep.subr.mxu0 0.0
        %1331 = vmatpush1.msra.mxu0 0.0
        %1332 = vmatprep.subr.mxu0 0.0
        %1333 = vmatpush1.msra.mxu0 0.0
        %1334 = vmatprep.subr.mxu0 0.0
        %1335 = vmatpush1.msra.mxu0 0.0
        %1336 = vmatprep.subr.mxu0 0.0
        %1337 = vmatpush1.msra.mxu0 0.0
        %1338 = vmatprep.subr.mxu0 0.0
        %1339 = vmatpush1.msra.mxu0 0.0
        %1340 = vmatprep.subr.mxu0 0.0
        %1341 = vmatpush1.msra.mxu0 0.0
        %1342 = vmatprep.subr.mxu0 0.0
        %1343 = vmatpush1.msra.mxu0 0.0
        %1344 = vmatprep.subr.mxu0 0.0
        %1345 = vmatpush1.msra.mxu0 0.0
        %1346 = vmatprep.subr.mxu0 0.0
        %1347 = vmatpush1.msra.mxu0 0.0
        %1348 = vmatprep.subr.mxu0 0.0
        %1349 = vmatpush1.msra.mxu0 0.0
        %1350 = vmatprep.subr.mxu0 0.0
        %1351 = vmatpush1.msra.mxu0 0.0
        %1352 = vmatprep.subr.mxu0 0.0
        %1353 = vmatpush1.msra.mxu0 0.0
        %1354 = vmatprep.mubr.f32.mxu0 0.0
        %1355 = vmatmul.mubr.f32.gmra.mrb[0].mxu0 %v1288
        %v1356 = vpop.f32.mrb[0].mxu0
        %v1357 = vadd.f32 %v1285, %v1356
        %v1358 = vpop.f32.mrb[0].mxu0
        %1359 = vdwg.mxu0
        %v1360 = vadd.f32 %v1188, %v1357
        %v1361 = vsel %vm329, %v1360, 0.0
        %1362 = vadd.xlane.f32.xlu0 %v1361
        %v1363 = vpop.xlane.xlu0 %1362
        %v1364 = vmul.f32 %v1363, %v1168
        %v1365 = vsub.f32 %v1360, %v1364
        %v1366 = vmul.f32 %v1365, %v1365
        %v1367 = vsel %vm329, %v1366, 0.0
        %1368 = vadd.xlane.f32.xlu0 %v1367
        %v1369 = vpop.xlane.xlu0 %1368
        %v1370 = vmul.f32 %v1369, %v1168
        %v1371 = vadd.f32 %v1370, 1e-05
        %v1372 = vrsqrt.pop %v1371
        %v1373 = vmul.f32 %v1365, %v1372
        %v1374 = vlaneseq
        %v1375 = vshrl.u32 %v1374, 7
        %v1376 = vsub.s32 4, %v1375
        %v1377 = vrot.slane %v316, %v1376
        %v1378 = vmul.f32 %v1373, %v1377
        %v1379 = vlaneseq
        %v1380 = vshrl.u32 %v1379, 7
        %v1381 = vsub.s32 5, %v1380
        %v1382 = vrot.slane %v316, %v1381
        %v1383 = vadd.f32 %v1378, %v1382
        %1384 = vst.msk [vmem:[%s311] sm:$0xff] %vm329, %v1383
        %s1385 = sand.u32 %s204, 1
        %s1386 = scalar_lea.sflag [#allocation5], %s1385
        %s1387 = sand.u32 %s204, 1
        %s1388 = smul.addr %s1387, 8
        %s1389 = scalar_lea.vmem [#allocation6], %s1388
        // Predicated region
        $region57: #{tpu_custom_call.1} parent=51 // pred_check
          %p1390 = pneg %p214
        $region58: #{tpu_custom_call.1} parent=51 // pred_check_branch
          %1392 = sbr.rel (%p1390) target = $region60
        $region59: #{tpu_custom_call.1} parent=51 // pred_region
          %s1394 = ssub.s32 128, 128
          %1395 = vsyncadd %s1386, %s1394
          %s1396 = smul.addr %s23, 128
          %s1397 = scalar_lea.hbm %s8, %s1396
          %s1399 = sshll.u32 %s1389, 4
          %s1400 = int_to_ptr.vmem [resolvable:$true] %s1399
          %1402 = dma.vmem_to_hbm [thread:$0]  %s1400, 128, %s1397, %s1386
        $region60: #{tpu_custom_call.1} parent=51 // pred_fallthru
          _
      $region52: #{tpu_custom_call.1} parent=5 // pred_fallthru
        _
      %p1403 = scmp.le.s32.totalorder 2, %s18
      // Predicated region
      $region61: #{tpu_custom_call.1} parent=5 // pred_check
        %p1404 = pneg %p1403
      $region62: #{tpu_custom_call.1} parent=5 // pred_check_branch
        %1406 = sbr.rel (%p1404) target = $region64
      $region63: #{tpu_custom_call.1} parent=5 // pred_region
        %s1407 = ssub.s32 %s18, 2
        // Predicated region
        $region65: #{tpu_custom_call.1} parent=63 // pred_check
          %p1408 = pneg %p220
        $region66: #{tpu_custom_call.1} parent=63 // pred_check_branch
          %1410 = sbr.rel (%p1408) target = $region68
        $region67: #{tpu_custom_call.1} parent=63 // pred_region
          %s1411 = sand.u32 %s205, 1
          %s1412 = scalar_lea.sflag [#allocation5], %s1411
          %s1413 = sand.u32 %s205, 1
          %s1414 = smul.addr %s1413, 8
          %s1415 = scalar_lea.vmem [#allocation6], %s1414
          %1416 = dma.done %s1412, 128
        $region68: #{tpu_custom_call.1} parent=63 // pred_fallthru
          _
      $region64: #{tpu_custom_call.1} parent=5 // pred_fallthru
        _
    $region6: #{tpu_custom_call.1} parent=1 // loop_footer
      %s22 = sadd.s32 1, %s18
    $region7: #{tpu_custom_call.1} parent=1 // loop_footer_branch
      %17 = sbr.rel target = $region3
    $region8: #{tpu_custom_call.1} parent=1 // loop_exit
      _
    %1417 = vsyncpa [#allocation4], 1
    %s1418 = scalar_lea.sflag [#allocation4], 1
    %1419 = vsyncpa %s1418, 1
    %1420 = vsyncpa [#allocation5], 1
    %s1421 = scalar_lea.sflag [#allocation5], 1
    %1422 = vsyncpa %s1421, 1

</llo_original>
